<compile_context>
chip_gen: v6e
topology: v6e:2x2x1
jax: 0.10.0
libtpu: 0.0.40
codegen_flags: <defaults>
</compile_context>

<pallas_src>
import functools
import math

import jax
import jax.numpy as jnp
from jax import lax
from jax.experimental import pallas as pl
from jax.experimental.pallas import tpu as pltpu


def _layer_norm(x, gamma, beta, eps=1e-6, *, approx=False):
    """OpenNMT-style LayerNorm: a_2 * (x - mean) / (std + eps) + b_2, unbiased std."""
    d = x.shape[-1]
    mean = jnp.mean(x, axis=-1, keepdims=True)
    var = jnp.sum((x - mean) ** 2, axis=-1, keepdims=True) / (d - 1)  # torch.std unbiased
    std = jnp.sqrt(var)
    if approx:
        inv = pl.reciprocal(std + eps, approx=True)      # EUP slot, ~free inside the kernel
    else:
        inv = 1.0 / (std + eps)
    return gamma * (x - mean) * inv + beta


def encoder_layer_kernel(
    x_ref, mask_ref,
    ln1_g_ref, ln1_b_ref,
    wq_ref, bq_ref,
    wkv_ref, bkv_ref,
    wo_ref, bo_ref,
    ln2_g_ref, ln2_b_ref,
    w1_ref, b1_ref, w2_ref, b2_ref,
    out_ref,
    k_scr, v_scr,
    *, heads, d_k, d_v, tq,
):
    qi = pl.program_id(1)
    neg = jnp.float32(-1e18)
    hdk = heads * d_k
    bf16 = jnp.bfloat16
    f32 = jnp.float32

    # ---- once per batch element: K/V projection over the full sequence (head-major bf16) ----
    @pl.when(qi == 0)
    def _():
        xn = _layer_norm(x_ref[0], ln1_g_ref[...], ln1_b_ref[...], approx=True)   # [L, D]
        kv = jnp.dot(xn.astype(bf16), wkv_ref[...],
                     preferred_element_type=f32) + bkv_ref[...]                    # [L, H*(dk+dv)]
        for h in range(heads):
            k_scr[h] = kv[:, h * d_k:(h + 1) * d_k].astype(bf16)
            v_scr[h] = kv[:, hdk + h * d_v: hdk + (h + 1) * d_v].astype(bf16)

    # ---- per query tile ----
    q_start = pl.multiple_of(qi * tq, tq)
    x_t = x_ref[0, pl.ds(q_start, tq), :]                                          # [TQ, D] f32 residual
    xn_t = _layer_norm(x_t, ln1_g_ref[...], ln1_b_ref[...], approx=True)
    # 1/sqrt(d_k) is folded into wq/bq in the wrapper.
    q_t = jnp.dot(xn_t.astype(bf16), wq_ref[...],
                  preferred_element_type=f32) + bq_ref[...]                        # [TQ, H*dk] f32
    mask_b = mask_ref[0] != 0                                                      # [TQ, L], once per tile

    # Per-head attention: bounds the live score working set to one [TQ, L] f32 tensor.
    ctx_parts = []
    for h in range(heads):
        q_h = q_t[:, h * d_k:(h + 1) * d_k].astype(bf16)                           # [TQ, dk]
        # NT matmul (contraction on minor dim of both operands) -> no K transpose per tile.
        s = lax.dot_general(q_h, k_scr[h], (((1,), (1,)), ((), ())),
                            preferred_element_type=f32)                            # [TQ, L] f32
        s = jnp.where(mask_b, neg, s)                                              # masked_fill(mask, -1e18)
        m = jnp.max(s, axis=-1, keepdims=True)                                     # f32 row max
        p = jnp.exp((s - m).astype(bf16))                                          # bf16 exp (2x EUP v6e/v7x)
        denom = jnp.sum(p.astype(f32), axis=-1, keepdims=True)                     # f32 accumulation
        ctx_h = jnp.dot(p, v_scr[h], preferred_element_type=f32)                   # [TQ, dv] unnormalized
        ctx_parts.append((ctx_h * pl.reciprocal(denom, approx=True)).astype(bf16))
    ctx = jnp.concatenate(ctx_parts, axis=-1)                                      # [TQ, H*dv] bf16

    # single output projection, contraction K = H*dv (deep MXU use, no [H,TQ,D] intermediate)
    attn = jnp.dot(ctx, wo_ref[...], preferred_element_type=f32) + bo_ref[...]     # [TQ, D]

    mid = attn + x_t                                                               # residual (dropout == id)

    # ---- position-wise feed-forward ----
    midn = _layer_norm(mid, ln2_g_ref[...], ln2_b_ref[...], approx=True)
    inter = jnp.maximum(
        jnp.dot(midn.astype(bf16), w1_ref[...],
                preferred_element_type=f32) + b1_ref[...], 0.0)
    ffn = jnp.dot(inter.astype(bf16), w2_ref[...],
                  preferred_element_type=f32) + b2_ref[...]

    out_ref[0] = ffn + mid


def _pick_tq(L):
    """Query-tile size. v5e (128-row MXU) prefers 128; v6e/v7x prefer 256."""
    try:
        kind = jax.devices()[0].device_kind.lower()
        cap = 128 if ("v5 lite" in kind or "v5e" in kind) else 256
    except Exception:
        cap = 256
    if L <= cap:
        return L
    for t in (cap, 128, 64, 32, 16, 8):
        if L % t == 0:
            return t
    return L   # TODO(synk): pad L for prime-ish lengths instead of full-sequence fallback


def _device_vmem_capacity():
    try:
        return int(pltpu.get_tpu_info().vmem_capacity_bytes)
    except Exception:
        return 64 << 20   # conservative (v7x per-core VMEM)


def transformer_encoder_layer(x, mask, params, *, heads, d_k, d_v):
    """x: [B, L, D] float32, mask: [B, L, L] (nonzero == masked)."""
    B, L, D = x.shape
    d_ff = params["w1"].shape[1]
    tq = _pick_tq(L)
    nq = L // tq
    bf16 = jnp.bfloat16
    scale = 1.0 / math.sqrt(d_k)

    mask_i8 = mask.astype(jnp.int8)                     # 4x less HBM/VMEM than int32

    # pack / pre-layout weights once in the wrapper (bf16 matmul operands, f32 biases)
    wq = (params["wq"] * scale).astype(bf16)            # fold 1/sqrt(d_k) into the Q projection
    bq = (params["bq"] * scale).astype(jnp.float32)
    wkv = jnp.concatenate([params["wk"], params["wv"]], axis=1).astype(bf16)
    bkv = jnp.concatenate([params["bk"], params["bv"]], axis=1).astype(jnp.float32)

    param_list = [
        params["ln1_g"], params["ln1_b"],
        wq, bq, wkv, bkv,
        params["wo"].astype(bf16), params["bo"],        # wo stays [H*dv, D] for the single dot
        params["ln2_g"], params["ln2_b"],
        params["w1"].astype(bf16), params["b1"],
        params["w2"].astype(bf16), params["b2"],
    ]

    def full_spec(arr):
        nd = arr.ndim
        return pl.BlockSpec(arr.shape, lambda b, q, _nd=nd: (0,) * _nd)

    kernel = functools.partial(encoder_layer_kernel,
                               heads=heads, d_k=d_k, d_v=d_v, tq=tq)

    grid_spec = pltpu.PrefetchScalarGridSpec(
        num_scalar_prefetch=0,
        grid=(B, nq),
        in_specs=[
            pl.BlockSpec((1, L, D), lambda b, q: (b, 0, 0)),    # x: full seq, resident across q
            pl.BlockSpec((1, tq, L), lambda b, q: (b, q, 0)),   # mask: per query tile, int8
        ] + [full_spec(p) for p in param_list],                 # weights resident
        out_specs=pl.BlockSpec((1, tq, D), lambda b, q: (b, q, 0)),
        scratch_shapes=[
            pltpu.VMEM((heads, L, d_k), bf16),                  # K (head-major, bf16)
            pltpu.VMEM((heads, L, d_v), bf16),                  # V (head-major, bf16)
        ],
    )

    # explicit scoped-VMEM budget, clamped to the physical device VMEM (minus headroom)
    w_bytes = sum(int(p.size) * p.dtype.itemsize for p in param_list)
    block_bytes = L * D * 4 + tq * L * 1 + tq * D * 4
    scratch_bytes = heads * L * (d_k + d_v) * 2
    live_bytes = (tq * L * 8                               # per-head scores f32 + p bf16
                  + tq * heads * (d_k + d_v) * 4           # q_t + ctx parts
                  + 2 * tq * d_ff * 4                      # FFN intermediates
                  + 6 * tq * D * 4                         # x_t / mid / attn / out temps
                  + L * heads * (d_k + d_v) * 4            # qi==0 kv intermediate
                  + L * D * 4)                             # qi==0 LN intermediate
    need = 2 * (w_bytes + block_bytes) + scratch_bytes + live_bytes + (4 << 20)
    cap = _device_vmem_capacity() - (8 << 20)
    vmem_limit = int(min(max(need, 32 << 20), cap))

    flops = (2 * B * L * D * heads * (d_k + d_v)           # K/V projection
             + 2 * B * L * D * heads * d_k                 # Q projection
             + 2 * B * heads * L * L * (d_k + d_v)         # QK^T + PV
             + 2 * B * L * heads * d_v * D                 # output projection
             + 4 * B * L * D * d_ff)                       # FFN
    cost = pl.CostEstimate(
        flops=int(flops),
        transcendentals=int(B * heads * L * L),
        bytes_accessed=int(2 * x.size * 4 + mask_i8.size + w_bytes),
    )

    return pl.pallas_call(
        kernel,
        out_shape=jax.ShapeDtypeStruct((B, L, D), jnp.float32),
        grid_spec=grid_spec,
        compiler_params=pltpu.CompilerParams(
            # q axis must remain "arbitrary": K/V scratch filled at qi==0 is reused across q.
            dimension_semantics=("parallel", "arbitrary"),
            vmem_limit_bytes=vmem_limit,
        ),
        cost_estimate=cost,
    )(x, mask_i8, *param_list)


def _reference(x, mask, params, *, heads, d_k, d_v, matmul_dtype=jnp.float32):
    """Pure-JAX reference. matmul_dtype=bfloat16 mirrors the kernel's MXU/EUP casts."""
    def mm(a, b):
        return jnp.dot(a.astype(matmul_dtype), b.astype(matmul_dtype),
                       preferred_element_type=jnp.float32)

    def softmax(s):
        m = jnp.max(s, axis=-1, keepdims=True)
        if matmul_dtype == jnp.bfloat16:
            p = jnp.exp((s - m).astype(jnp.bfloat16)).astype(jnp.float32)
        else:
            p = jnp.exp(s - m)
        return p / jnp.sum(p, axis=-1, keepdims=True)

    def one(xb, mb):
        xn = _layer_norm(xb, params["ln1_g"], params["ln1_b"])
        q = mm(xn, params["wq"]) + params["bq"]
        k = mm(xn, params["wk"]) + params["bk"]
        v = mm(xn, params["wv"]) + params["bv"]
        scale = 1.0 / math.sqrt(d_k)
        ctxs = []
        for h in range(heads):
            qh = q[:, h * d_k:(h + 1) * d_k]
            kh = k[:, h * d_k:(h + 1) * d_k]
            vh = v[:, h * d_v:(h + 1) * d_v]
            s = mm(qh, kh.T) * scale
            s = jnp.where(mb != 0, jnp.float32(-1e18), s)
            p = softmax(s)
            ctxs.append(mm(p, vh))
        ctx = jnp.concatenate(ctxs, axis=-1)
        mid = mm(ctx, params["wo"]) + params["bo"] + xb
        midn = _layer_norm(mid, params["ln2_g"], params["ln2_b"])
        inter = jax.nn.relu(mm(midn, params["w1"]) + params["b1"])
        return mm(inter, params["w2"]) + params["b2"] + mid

    return jax.vmap(one)(x, mask)


def init_params(key, d_model, heads, d_ff, d_k, d_v):
    ks = jax.random.split(key, 8)
    s = 0.05
    return {
        "ln1_g": jnp.ones((1, d_model), jnp.float32),
        "ln1_b": jnp.zeros((1, d_model), jnp.float32),
        "wq": s * jax.random.normal(ks[0], (d_model, heads * d_k), jnp.float32),
        "bq": jnp.zeros((1, heads * d_k), jnp.float32),
        "wk": s * jax.random.normal(ks[1], (d_model, heads * d_k), jnp.float32),
        "bk": jnp.zeros((1, heads * d_k), jnp.float32),
        "wv": s * jax.random.normal(ks[2], (d_model, heads * d_v), jnp.float32),
        "bv": jnp.zeros((1, heads * d_v), jnp.float32),
        "wo": s * jax.random.normal(ks[3], (heads * d_v, d_model), jnp.float32),
        "bo": jnp.zeros((1, d_model), jnp.float32),
        "ln2_g": jnp.ones((1, d_model), jnp.float32),
        "ln2_b": jnp.zeros((1, d_model), jnp.float32),
        "w1": s * jax.random.normal(ks[4], (d_model, d_ff), jnp.float32),
        "b1": jnp.zeros((1, d_ff), jnp.float32),
        "w2": s * jax.random.normal(ks[5], (d_ff, d_model), jnp.float32),
        "b2": jnp.zeros((1, d_model), jnp.float32),
    }


if __name__ == "__main__":
    B, L = 2, 8
    d_model, heads, d_ff, d_k, d_v = 32, 4, 64, 8, 8

    key = jax.random.PRNGKey(0)
    kx, kp = jax.random.split(key)

    x = jax.random.normal(kx, (B, L, d_model), jnp.float32)

    # mask: nonzero == masked out. Mask the last two key positions of batch 1.
    mask = jnp.zeros((B, L, L), jnp.int32)
    mask = mask.at[1, :, L - 2:].set(1)

    params = init_params(kp, d_model, heads, d_ff, d_k, d_v)

    out = transformer_encoder_layer(x, mask, params, heads=heads, d_k=d_k, d_v=d_v)
    out = jax.block_until_ready(out)

    ref_bf16 = _reference(x, mask, params, heads=heads, d_k=d_k, d_v=d_v,
                          matmul_dtype=jnp.bfloat16)
    ref_f32 = _reference(x, mask, params, heads=heads, d_k=d_k, d_v=d_v,
                         matmul_dtype=jnp.float32)

    assert out.shape == (B, L, d_model)
    assert jnp.allclose(out, ref_bf16, atol=2e-3, rtol=2e-3), "mismatch vs bf16-matmul reference"
    assert jnp.allclose(out, ref_f32, atol=5e-2, rtol=5e-2), "mismatch vs f32 reference"

    print("KERNEL_OK")
</pallas_src>

<mosaic_0001>
module attributes {stable_mosaic.version = 11 : i64} {
  func.func @encoder_layer_kernel(%arg0: i32, %arg1: i32, %arg2: memref<1x8x32xf32, #tpu.memory_space<vmem>>, %arg3: memref<1x8x8xi8, #tpu.memory_space<vmem>>, %arg4: memref<1x32xf32, #tpu.memory_space<vmem>>, %arg5: memref<1x32xf32, #tpu.memory_space<vmem>>, %arg6: memref<32x32xbf16, #tpu.memory_space<vmem>>, %arg7: memref<1x32xf32, #tpu.memory_space<vmem>>, %arg8: memref<32x64xbf16, #tpu.memory_space<vmem>>, %arg9: memref<1x64xf32, #tpu.memory_space<vmem>>, %arg10: memref<32x32xbf16, #tpu.memory_space<vmem>>, %arg11: memref<1x32xf32, #tpu.memory_space<vmem>>, %arg12: memref<1x32xf32, #tpu.memory_space<vmem>>, %arg13: memref<1x32xf32, #tpu.memory_space<vmem>>, %arg14: memref<32x64xbf16, #tpu.memory_space<vmem>>, %arg15: memref<1x64xf32, #tpu.memory_space<vmem>>, %arg16: memref<64x32xbf16, #tpu.memory_space<vmem>>, %arg17: memref<1x32xf32, #tpu.memory_space<vmem>>, %arg18: memref<1x8x32xf32, #tpu.memory_space<vmem>>, %arg19: memref<4x8x8xbf16, #tpu.memory_space<vmem>>, %arg20: memref<4x8x8xbf16, #tpu.memory_space<vmem>>) attributes {dimension_semantics = [#tpu.dimension_semantics<parallel>, #tpu.dimension_semantics<arbitrary>], iteration_bounds = array<i64: 2, 1>, scalar_prefetch = 0 : i64, scratch_operands = 2 : i64, tpu.core_type = #tpu.core_type<tc>, window_params = [{transform_indices = @transform_0, window_bounds = array<i64: 1, 8, 32>}, {transform_indices = @transform_1, window_bounds = array<i64: 1, 8, 8>}, {pipeline_mode = #tpu.pipeline_mode<synchronous>, transform_indices = @transform_2, window_bounds = array<i64: 1, 32>}, {pipeline_mode = #tpu.pipeline_mode<synchronous>, transform_indices = @transform_3, window_bounds = array<i64: 1, 32>}, {pipeline_mode = #tpu.pipeline_mode<synchronous>, transform_indices = @transform_4, window_bounds = array<i64: 32, 32>}, {pipeline_mode = #tpu.pipeline_mode<synchronous>, transform_indices = @transform_5, window_bounds = array<i64: 1, 32>}, {pipeline_mode = #tpu.pipeline_mode<synchronous>, transform_indices = @transform_6, window_bounds = array<i64: 32, 64>}, {pipeline_mode = #tpu.pipeline_mode<synchronous>, transform_indices = @transform_7, window_bounds = array<i64: 1, 64>}, {pipeline_mode = #tpu.pipeline_mode<synchronous>, transform_indices = @transform_8, window_bounds = array<i64: 32, 32>}, {pipeline_mode = #tpu.pipeline_mode<synchronous>, transform_indices = @transform_9, window_bounds = array<i64: 1, 32>}, {pipeline_mode = #tpu.pipeline_mode<synchronous>, transform_indices = @transform_10, window_bounds = array<i64: 1, 32>}, {pipeline_mode = #tpu.pipeline_mode<synchronous>, transform_indices = @transform_11, window_bounds = array<i64: 1, 32>}, {pipeline_mode = #tpu.pipeline_mode<synchronous>, transform_indices = @transform_12, window_bounds = array<i64: 32, 64>}, {pipeline_mode = #tpu.pipeline_mode<synchronous>, transform_indices = @transform_13, window_bounds = array<i64: 1, 64>}, {pipeline_mode = #tpu.pipeline_mode<synchronous>, transform_indices = @transform_14, window_bounds = array<i64: 64, 32>}, {pipeline_mode = #tpu.pipeline_mode<synchronous>, transform_indices = @transform_15, window_bounds = array<i64: 1, 32>}, {transform_indices = @transform_16, window_bounds = array<i64: 1, 8, 32>}]} {
    %c0_i32 = arith.constant 0 : i32
    %0 = arith.cmpi eq, %arg1, %c0_i32 : i32
    %1 = arith.extui %0 : i1 to i32
    %c0_i32_0 = arith.constant 0 : i32
    %2 = arith.cmpi ne, %1, %c0_i32_0 : i32
    scf.if %2 {
      %c0_87 = arith.constant 0 : index
      %c0_88 = arith.constant 0 : index
      %c0_89 = arith.constant 0 : index
      %185 = vector.load %arg2[%c0_87, %c0_88, %c0_89] : memref<1x8x32xf32, #tpu.memory_space<vmem>>, vector<1x8x32xf32>
      %186 = vector.shape_cast %185 : vector<1x8x32xf32> to vector<8x32xf32>
      %c0_90 = arith.constant 0 : index
      %c0_91 = arith.constant 0 : index
      %187 = vector.load %arg4[%c0_90, %c0_91] : memref<1x32xf32, #tpu.memory_space<vmem>>, vector<1x32xf32>
      %c0_92 = arith.constant 0 : index
      %c0_93 = arith.constant 0 : index
      %188 = vector.load %arg5[%c0_92, %c0_93] : memref<1x32xf32, #tpu.memory_space<vmem>>, vector<1x32xf32>
      %cst_94 = arith.constant dense<0.000000e+00> : vector<8xf32>
      %189 = vector.multi_reduction <add>, %186, %cst_94 [1] : vector<8x32xf32> to vector<8xf32>
      %190 = vector.shape_cast %189 : vector<8xf32> to vector<8x1xf32>
      %cst_95 = arith.constant 3.200000e+01 : f32
      %191 = vector.broadcast %cst_95 : f32 to vector<8x1xf32>
      %192 = arith.divf %190, %191 : vector<8x1xf32>
      %193 = vector.broadcast %192 : vector<8x1xf32> to vector<8x32xf32>
      %194 = arith.subf %186, %193 : vector<8x32xf32>
      %195 = arith.mulf %194, %194 : vector<8x32xf32>
      %cst_96 = arith.constant dense<0.000000e+00> : vector<8xf32>
      %196 = vector.multi_reduction <add>, %195, %cst_96 [1] : vector<8x32xf32> to vector<8xf32>
      %197 = vector.shape_cast %196 : vector<8xf32> to vector<8x1xf32>
      %cst_97 = arith.constant 3.100000e+01 : f32
      %198 = vector.broadcast %cst_97 : f32 to vector<8x1xf32>
      %199 = arith.divf %197, %198 : vector<8x1xf32>
      %200 = math.sqrt %199 : vector<8x1xf32>
      %cst_98 = arith.constant 9.99999997E-7 : f32
      %201 = vector.broadcast %cst_98 : f32 to vector<8x1xf32>
      %202 = arith.addf %200, %201 : vector<8x1xf32>
      %203 = tpu.reciprocal %202 {approx = true} : vector<8x1xf32> -> vector<8x1xf32>
      %204 = vector.broadcast %192 : vector<8x1xf32> to vector<8x32xf32>
      %205 = arith.subf %186, %204 : vector<8x32xf32>
      %206 = vector.broadcast %187 : vector<1x32xf32> to vector<8x32xf32>
      %207 = arith.mulf %206, %205 : vector<8x32xf32>
      %208 = vector.broadcast %203 : vector<8x1xf32> to vector<8x32xf32>
      %209 = arith.mulf %207, %208 : vector<8x32xf32>
      %210 = vector.broadcast %188 : vector<1x32xf32> to vector<8x32xf32>
      %211 = arith.addf %209, %210 : vector<8x32xf32>
      %212 = arith.truncf %211 : vector<8x32xf32> to vector<8x32xbf16>
      %c0_99 = arith.constant 0 : index
      %c0_100 = arith.constant 0 : index
      %213 = vector.load %arg8[%c0_99, %c0_100] : memref<32x64xbf16, #tpu.memory_space<vmem>>, vector<32x64xbf16>
      %cst_101 = arith.constant dense<0.000000e+00> : vector<8x64xf32>
      %214 = tpu.matmul %212, %213, %cst_101 {dimension_numbers = #tpu.dot_dimension_numbers<[1], [0], [0], [1], [0, 0, 1, 1], [], []>} : vector<8x32xbf16>, vector<32x64xbf16>, vector<8x64xf32> -> vector<8x64xf32>
      %c0_102 = arith.constant 0 : index
      %c0_103 = arith.constant 0 : index
      %215 = vector.load %arg9[%c0_102, %c0_103] : memref<1x64xf32, #tpu.memory_space<vmem>>, vector<1x64xf32>
      %216 = vector.broadcast %215 : vector<1x64xf32> to vector<8x64xf32>
      %217 = arith.addf %214, %216 : vector<8x64xf32>
      %218 = vector.extract_strided_slice %217 {offsets = [0, 0], sizes = [8, 8], strides = [1, 1]} : vector<8x64xf32> to vector<8x8xf32>
      %219 = arith.truncf %218 : vector<8x8xf32> to vector<8x8xbf16>
      %c0_104 = arith.constant 0 : index
      %c0_105 = arith.constant 0 : index
      %c0_106 = arith.constant 0 : index
      %220 = vector.load %arg19[%c0_104, %c0_105, %c0_106] : memref<4x8x8xbf16, #tpu.memory_space<vmem>>, vector<1x8x8xbf16>
      %221 = vector.shape_cast %220 : vector<1x8x8xbf16> to vector<8x8xbf16>
      %222 = vector.shape_cast %219 : vector<8x8xbf16> to vector<1x8x8xbf16>
      tpu.vector_store %arg19[%c0_104, %c0_105, %c0_106], %222 {strides = array<i32>} : memref<4x8x8xbf16, #tpu.memory_space<vmem>>, vector<1x8x8xbf16>,
      %223 = vector.extract_strided_slice %217 {offsets = [0, 32], sizes = [8, 8], strides = [1, 1]} : vector<8x64xf32> to vector<8x8xf32>
      %224 = arith.truncf %223 : vector<8x8xf32> to vector<8x8xbf16>
      %c0_107 = arith.constant 0 : index
      %c0_108 = arith.constant 0 : index
      %c0_109 = arith.constant 0 : index
      %225 = vector.load %arg20[%c0_107, %c0_108, %c0_109] : memref<4x8x8xbf16, #tpu.memory_space<vmem>>, vector<1x8x8xbf16>
      %226 = vector.shape_cast %225 : vector<1x8x8xbf16> to vector<8x8xbf16>
      %227 = vector.shape_cast %224 : vector<8x8xbf16> to vector<1x8x8xbf16>
      tpu.vector_store %arg20[%c0_107, %c0_108, %c0_109], %227 {strides = array<i32>} : memref<4x8x8xbf16, #tpu.memory_space<vmem>>, vector<1x8x8xbf16>,
      %228 = vector.extract_strided_slice %217 {offsets = [0, 8], sizes = [8, 8], strides = [1, 1]} : vector<8x64xf32> to vector<8x8xf32>
      %229 = arith.truncf %228 : vector<8x8xf32> to vector<8x8xbf16>
      %c1_110 = arith.constant 1 : index
      %c0_111 = arith.constant 0 : index
      %c0_112 = arith.constant 0 : index
      %230 = vector.load %arg19[%c1_110, %c0_111, %c0_112] : memref<4x8x8xbf16, #tpu.memory_space<vmem>>, vector<1x8x8xbf16>
      %231 = vector.shape_cast %230 : vector<1x8x8xbf16> to vector<8x8xbf16>
      %232 = vector.shape_cast %229 : vector<8x8xbf16> to vector<1x8x8xbf16>
      tpu.vector_store %arg19[%c1_110, %c0_111, %c0_112], %232 {strides = array<i32>} : memref<4x8x8xbf16, #tpu.memory_space<vmem>>, vector<1x8x8xbf16>,
      %233 = vector.extract_strided_slice %217 {offsets = [0, 40], sizes = [8, 8], strides = [1, 1]} : vector<8x64xf32> to vector<8x8xf32>
      %234 = arith.truncf %233 : vector<8x8xf32> to vector<8x8xbf16>
      %c1_113 = arith.constant 1 : index
      %c0_114 = arith.constant 0 : index
      %c0_115 = arith.constant 0 : index
      %235 = vector.load %arg20[%c1_113, %c0_114, %c0_115] : memref<4x8x8xbf16, #tpu.memory_space<vmem>>, vector<1x8x8xbf16>
      %236 = vector.shape_cast %235 : vector<1x8x8xbf16> to vector<8x8xbf16>
      %237 = vector.shape_cast %234 : vector<8x8xbf16> to vector<1x8x8xbf16>
      tpu.vector_store %arg20[%c1_113, %c0_114, %c0_115], %237 {strides = array<i32>} : memref<4x8x8xbf16, #tpu.memory_space<vmem>>, vector<1x8x8xbf16>,
      %238 = vector.extract_strided_slice %217 {offsets = [0, 16], sizes = [8, 8], strides = [1, 1]} : vector<8x64xf32> to vector<8x8xf32>
      %239 = arith.truncf %238 : vector<8x8xf32> to vector<8x8xbf16>
      %c2_116 = arith.constant 2 : index
      %c0_117 = arith.constant 0 : index
      %c0_118 = arith.constant 0 : index
      %240 = vector.load %arg19[%c2_116, %c0_117, %c0_118] : memref<4x8x8xbf16, #tpu.memory_space<vmem>>, vector<1x8x8xbf16>
      %241 = vector.shape_cast %240 : vector<1x8x8xbf16> to vector<8x8xbf16>
      %242 = vector.shape_cast %239 : vector<8x8xbf16> to vector<1x8x8xbf16>
      tpu.vector_store %arg19[%c2_116, %c0_117, %c0_118], %242 {strides = array<i32>} : memref<4x8x8xbf16, #tpu.memory_space<vmem>>, vector<1x8x8xbf16>,
      %243 = vector.extract_strided_slice %217 {offsets = [0, 48], sizes = [8, 8], strides = [1, 1]} : vector<8x64xf32> to vector<8x8xf32>
      %244 = arith.truncf %243 : vector<8x8xf32> to vector<8x8xbf16>
      %c2_119 = arith.constant 2 : index
      %c0_120 = arith.constant 0 : index
      %c0_121 = arith.constant 0 : index
      %245 = vector.load %arg20[%c2_119, %c0_120, %c0_121] : memref<4x8x8xbf16, #tpu.memory_space<vmem>>, vector<1x8x8xbf16>
      %246 = vector.shape_cast %245 : vector<1x8x8xbf16> to vector<8x8xbf16>
      %247 = vector.shape_cast %244 : vector<8x8xbf16> to vector<1x8x8xbf16>
      tpu.vector_store %arg20[%c2_119, %c0_120, %c0_121], %247 {strides = array<i32>} : memref<4x8x8xbf16, #tpu.memory_space<vmem>>, vector<1x8x8xbf16>,
      %248 = vector.extract_strided_slice %217 {offsets = [0, 24], sizes = [8, 8], strides = [1, 1]} : vector<8x64xf32> to vector<8x8xf32>
      %249 = arith.truncf %248 : vector<8x8xf32> to vector<8x8xbf16>
      %c3_122 = arith.constant 3 : index
      %c0_123 = arith.constant 0 : index
      %c0_124 = arith.constant 0 : index
      %250 = vector.load %arg19[%c3_122, %c0_123, %c0_124] : memref<4x8x8xbf16, #tpu.memory_space<vmem>>, vector<1x8x8xbf16>
      %251 = vector.shape_cast %250 : vector<1x8x8xbf16> to vector<8x8xbf16>
      %252 = vector.shape_cast %249 : vector<8x8xbf16> to vector<1x8x8xbf16>
      tpu.vector_store %arg19[%c3_122, %c0_123, %c0_124], %252 {strides = array<i32>} : memref<4x8x8xbf16, #tpu.memory_space<vmem>>, vector<1x8x8xbf16>,
      %253 = vector.extract_strided_slice %217 {offsets = [0, 56], sizes = [8, 8], strides = [1, 1]} : vector<8x64xf32> to vector<8x8xf32>
      %254 = arith.truncf %253 : vector<8x8xf32> to vector<8x8xbf16>
      %c3_125 = arith.constant 3 : index
      %c0_126 = arith.constant 0 : index
      %c0_127 = arith.constant 0 : index
      %255 = vector.load %arg20[%c3_125, %c0_126, %c0_127] : memref<4x8x8xbf16, #tpu.memory_space<vmem>>, vector<1x8x8xbf16>
      %256 = vector.shape_cast %255 : vector<1x8x8xbf16> to vector<8x8xbf16>
      %257 = vector.shape_cast %254 : vector<8x8xbf16> to vector<1x8x8xbf16>
      tpu.vector_store %arg20[%c3_125, %c0_126, %c0_127], %257 {strides = array<i32>} : memref<4x8x8xbf16, #tpu.memory_space<vmem>>, vector<1x8x8xbf16>,
    } else {
    }
    %c8_i32 = arith.constant 8 : i32
    %3 = arith.muli %arg1, %c8_i32 : i32
    %4 = tpu.assume_multiple %3, 8 : i32
    %c0 = arith.constant 0 : index
    %5 = arith.index_cast %4 : i32 to index
    %c0_1 = arith.constant 0 : index
    %6 = vector.load %arg2[%c0, %5, %c0_1] : memref<1x8x32xf32, #tpu.memory_space<vmem>>, vector<1x8x32xf32>
    %7 = vector.shape_cast %6 : vector<1x8x32xf32> to vector<8x32xf32>
    %c0_2 = arith.constant 0 : index
    %c0_3 = arith.constant 0 : index
    %8 = vector.load %arg4[%c0_2, %c0_3] : memref<1x32xf32, #tpu.memory_space<vmem>>, vector<1x32xf32>
    %c0_4 = arith.constant 0 : index
    %c0_5 = arith.constant 0 : index
    %9 = vector.load %arg5[%c0_4, %c0_5] : memref<1x32xf32, #tpu.memory_space<vmem>>, vector<1x32xf32>
    %cst = arith.constant dense<0.000000e+00> : vector<8xf32>
    %10 = vector.multi_reduction <add>, %7, %cst [1] : vector<8x32xf32> to vector<8xf32>
    %11 = vector.shape_cast %10 : vector<8xf32> to vector<8x1xf32>
    %cst_6 = arith.constant 3.200000e+01 : f32
    %12 = vector.broadcast %cst_6 : f32 to vector<8x1xf32>
    %13 = arith.divf %11, %12 : vector<8x1xf32>
    %14 = vector.broadcast %13 : vector<8x1xf32> to vector<8x32xf32>
    %15 = arith.subf %7, %14 : vector<8x32xf32>
    %16 = arith.mulf %15, %15 : vector<8x32xf32>
    %cst_7 = arith.constant dense<0.000000e+00> : vector<8xf32>
    %17 = vector.multi_reduction <add>, %16, %cst_7 [1] : vector<8x32xf32> to vector<8xf32>
    %18 = vector.shape_cast %17 : vector<8xf32> to vector<8x1xf32>
    %cst_8 = arith.constant 3.100000e+01 : f32
    %19 = vector.broadcast %cst_8 : f32 to vector<8x1xf32>
    %20 = arith.divf %18, %19 : vector<8x1xf32>
    %21 = math.sqrt %20 : vector<8x1xf32>
    %cst_9 = arith.constant 9.99999997E-7 : f32
    %22 = vector.broadcast %cst_9 : f32 to vector<8x1xf32>
    %23 = arith.addf %21, %22 : vector<8x1xf32>
    %24 = tpu.reciprocal %23 {approx = true} : vector<8x1xf32> -> vector<8x1xf32>
    %25 = vector.broadcast %13 : vector<8x1xf32> to vector<8x32xf32>
    %26 = arith.subf %7, %25 : vector<8x32xf32>
    %27 = vector.broadcast %8 : vector<1x32xf32> to vector<8x32xf32>
    %28 = arith.mulf %27, %26 : vector<8x32xf32>
    %29 = vector.broadcast %24 : vector<8x1xf32> to vector<8x32xf32>
    %30 = arith.mulf %28, %29 : vector<8x32xf32>
    %31 = vector.broadcast %9 : vector<1x32xf32> to vector<8x32xf32>
    %32 = arith.addf %30, %31 : vector<8x32xf32>
    %33 = arith.truncf %32 : vector<8x32xf32> to vector<8x32xbf16>
    %c0_10 = arith.constant 0 : index
    %c0_11 = arith.constant 0 : index
    %34 = vector.load %arg6[%c0_10, %c0_11] : memref<32x32xbf16, #tpu.memory_space<vmem>>, vector<32x32xbf16>
    %cst_12 = arith.constant dense<0.000000e+00> : vector<8x32xf32>
    %35 = tpu.matmul %33, %34, %cst_12 {dimension_numbers = #tpu.dot_dimension_numbers<[1], [0], [0], [1], [0, 0, 1, 1], [], []>} : vector<8x32xbf16>, vector<32x32xbf16>, vector<8x32xf32> -> vector<8x32xf32>
    %c0_13 = arith.constant 0 : index
    %c0_14 = arith.constant 0 : index
    %36 = vector.load %arg7[%c0_13, %c0_14] : memref<1x32xf32, #tpu.memory_space<vmem>>, vector<1x32xf32>
    %37 = vector.broadcast %36 : vector<1x32xf32> to vector<8x32xf32>
    %38 = arith.addf %35, %37 : vector<8x32xf32>
    %c0_15 = arith.constant 0 : index
    %c0_16 = arith.constant 0 : index
    %c0_17 = arith.constant 0 : index
    %39 = vector.load %arg3[%c0_15, %c0_16, %c0_17] : memref<1x8x8xi8, #tpu.memory_space<vmem>>, vector<1x8x8xi8>
    %40 = vector.shape_cast %39 : vector<1x8x8xi8> to vector<8x8xi8>
    %c0_i8 = arith.constant 0 : i8
    %41 = vector.broadcast %c0_i8 : i8 to vector<8x8xi8>
    %42 = arith.cmpi ne, %40, %41 : vector<8x8xi8>
    %43 = vector.extract_strided_slice %38 {offsets = [0, 0], sizes = [8, 8], strides = [1, 1]} : vector<8x32xf32> to vector<8x8xf32>
    %44 = arith.truncf %43 : vector<8x8xf32> to vector<8x8xbf16>
    %c0_18 = arith.constant 0 : index
    %c0_19 = arith.constant 0 : index
    %c0_20 = arith.constant 0 : index
    %45 = vector.load %arg19[%c0_18, %c0_19, %c0_20] : memref<4x8x8xbf16, #tpu.memory_space<vmem>>, vector<1x8x8xbf16>
    %46 = vector.shape_cast %45 : vector<1x8x8xbf16> to vector<8x8xbf16>
    %cst_21 = arith.constant dense<0.000000e+00> : vector<8x8xf32>
    %47 = tpu.matmul %44, %46, %cst_21 {dimension_numbers = #tpu.dot_dimension_numbers<[1], [1], [0], [0], [0, 0, 1, 0], [], []>} : vector<8x8xbf16>, vector<8x8xbf16>, vector<8x8xf32> -> vector<8x8xf32>
    %cst_22 = arith.constant -9.99999984E+17 : f32
    %48 = vector.broadcast %cst_22 : f32 to vector<8x8xf32>
    %49 = arith.select %42, %48, %47 : vector<8x8xi1>, vector<8x8xf32>
    %cst_23 = arith.constant dense<0xFF800000> : vector<8xf32>
    %50 = vector.multi_reduction <maximumf>, %49, %cst_23 [1] : vector<8x8xf32> to vector<8xf32>
    %51 = vector.shape_cast %50 : vector<8xf32> to vector<8x1xf32>
    %52 = vector.broadcast %51 : vector<8x1xf32> to vector<8x8xf32>
    %53 = arith.subf %49, %52 : vector<8x8xf32>
    %54 = arith.truncf %53 : vector<8x8xf32> to vector<8x8xbf16>
    %55 = math.exp %54 : vector<8x8xbf16>
    %56 = arith.extf %55 : vector<8x8xbf16> to vector<8x8xf32>
    %cst_24 = arith.constant dense<0.000000e+00> : vector<8xf32>
    %57 = vector.multi_reduction <add>, %56, %cst_24 [1] : vector<8x8xf32> to vector<8xf32>
    %58 = vector.shape_cast %57 : vector<8xf32> to vector<8x1xf32>
    %c0_25 = arith.constant 0 : index
    %c0_26 = arith.constant 0 : index
    %c0_27 = arith.constant 0 : index
    %59 = vector.load %arg20[%c0_25, %c0_26, %c0_27] : memref<4x8x8xbf16, #tpu.memory_space<vmem>>, vector<1x8x8xbf16>
    %60 = vector.shape_cast %59 : vector<1x8x8xbf16> to vector<8x8xbf16>
    %cst_28 = arith.constant dense<0.000000e+00> : vector<8x8xf32>
    %61 = tpu.matmul %55, %60, %cst_28 {dimension_numbers = #tpu.dot_dimension_numbers<[1], [0], [0], [1], [0, 0, 1, 1], [], []>} : vector<8x8xbf16>, vector<8x8xbf16>, vector<8x8xf32> -> vector<8x8xf32>
    %62 = tpu.reciprocal %58 {approx = true} : vector<8x1xf32> -> vector<8x1xf32>
    %63 = vector.broadcast %62 : vector<8x1xf32> to vector<8x8xf32>
    %64 = arith.mulf %61, %63 : vector<8x8xf32>
    %65 = arith.truncf %64 : vector<8x8xf32> to vector<8x8xbf16>
    %66 = vector.extract_strided_slice %38 {offsets = [0, 8], sizes = [8, 8], strides = [1, 1]} : vector<8x32xf32> to vector<8x8xf32>
    %67 = arith.truncf %66 : vector<8x8xf32> to vector<8x8xbf16>
    %c1 = arith.constant 1 : index
    %c0_29 = arith.constant 0 : index
    %c0_30 = arith.constant 0 : index
    %68 = vector.load %arg19[%c1, %c0_29, %c0_30] : memref<4x8x8xbf16, #tpu.memory_space<vmem>>, vector<1x8x8xbf16>
    %69 = vector.shape_cast %68 : vector<1x8x8xbf16> to vector<8x8xbf16>
    %cst_31 = arith.constant dense<0.000000e+00> : vector<8x8xf32>
    %70 = tpu.matmul %67, %69, %cst_31 {dimension_numbers = #tpu.dot_dimension_numbers<[1], [1], [0], [0], [0, 0, 1, 0], [], []>} : vector<8x8xbf16>, vector<8x8xbf16>, vector<8x8xf32> -> vector<8x8xf32>
    %cst_32 = arith.constant -9.99999984E+17 : f32
    %71 = vector.broadcast %cst_32 : f32 to vector<8x8xf32>
    %72 = arith.select %42, %71, %70 : vector<8x8xi1>, vector<8x8xf32>
    %cst_33 = arith.constant dense<0xFF800000> : vector<8xf32>
    %73 = vector.multi_reduction <maximumf>, %72, %cst_33 [1] : vector<8x8xf32> to vector<8xf32>
    %74 = vector.shape_cast %73 : vector<8xf32> to vector<8x1xf32>
    %75 = vector.broadcast %74 : vector<8x1xf32> to vector<8x8xf32>
    %76 = arith.subf %72, %75 : vector<8x8xf32>
    %77 = arith.truncf %76 : vector<8x8xf32> to vector<8x8xbf16>
    %78 = math.exp %77 : vector<8x8xbf16>
    %79 = arith.extf %78 : vector<8x8xbf16> to vector<8x8xf32>
    %cst_34 = arith.constant dense<0.000000e+00> : vector<8xf32>
    %80 = vector.multi_reduction <add>, %79, %cst_34 [1] : vector<8x8xf32> to vector<8xf32>
    %81 = vector.shape_cast %80 : vector<8xf32> to vector<8x1xf32>
    %c1_35 = arith.constant 1 : index
    %c0_36 = arith.constant 0 : index
    %c0_37 = arith.constant 0 : index
    %82 = vector.load %arg20[%c1_35, %c0_36, %c0_37] : memref<4x8x8xbf16, #tpu.memory_space<vmem>>, vector<1x8x8xbf16>
    %83 = vector.shape_cast %82 : vector<1x8x8xbf16> to vector<8x8xbf16>
    %cst_38 = arith.constant dense<0.000000e+00> : vector<8x8xf32>
    %84 = tpu.matmul %78, %83, %cst_38 {dimension_numbers = #tpu.dot_dimension_numbers<[1], [0], [0], [1], [0, 0, 1, 1], [], []>} : vector<8x8xbf16>, vector<8x8xbf16>, vector<8x8xf32> -> vector<8x8xf32>
    %85 = tpu.reciprocal %81 {approx = true} : vector<8x1xf32> -> vector<8x1xf32>
    %86 = vector.broadcast %85 : vector<8x1xf32> to vector<8x8xf32>
    %87 = arith.mulf %84, %86 : vector<8x8xf32>
    %88 = arith.truncf %87 : vector<8x8xf32> to vector<8x8xbf16>
    %89 = vector.extract_strided_slice %38 {offsets = [0, 16], sizes = [8, 8], strides = [1, 1]} : vector<8x32xf32> to vector<8x8xf32>
    %90 = arith.truncf %89 : vector<8x8xf32> to vector<8x8xbf16>
    %c2 = arith.constant 2 : index
    %c0_39 = arith.constant 0 : index
    %c0_40 = arith.constant 0 : index
    %91 = vector.load %arg19[%c2, %c0_39, %c0_40] : memref<4x8x8xbf16, #tpu.memory_space<vmem>>, vector<1x8x8xbf16>
    %92 = vector.shape_cast %91 : vector<1x8x8xbf16> to vector<8x8xbf16>
    %cst_41 = arith.constant dense<0.000000e+00> : vector<8x8xf32>
    %93 = tpu.matmul %90, %92, %cst_41 {dimension_numbers = #tpu.dot_dimension_numbers<[1], [1], [0], [0], [0, 0, 1, 0], [], []>} : vector<8x8xbf16>, vector<8x8xbf16>, vector<8x8xf32> -> vector<8x8xf32>
    %cst_42 = arith.constant -9.99999984E+17 : f32
    %94 = vector.broadcast %cst_42 : f32 to vector<8x8xf32>
    %95 = arith.select %42, %94, %93 : vector<8x8xi1>, vector<8x8xf32>
    %cst_43 = arith.constant dense<0xFF800000> : vector<8xf32>
    %96 = vector.multi_reduction <maximumf>, %95, %cst_43 [1] : vector<8x8xf32> to vector<8xf32>
    %97 = vector.shape_cast %96 : vector<8xf32> to vector<8x1xf32>
    %98 = vector.broadcast %97 : vector<8x1xf32> to vector<8x8xf32>
    %99 = arith.subf %95, %98 : vector<8x8xf32>
    %100 = arith.truncf %99 : vector<8x8xf32> to vector<8x8xbf16>
    %101 = math.exp %100 : vector<8x8xbf16>
    %102 = arith.extf %101 : vector<8x8xbf16> to vector<8x8xf32>
    %cst_44 = arith.constant dense<0.000000e+00> : vector<8xf32>
    %103 = vector.multi_reduction <add>, %102, %cst_44 [1] : vector<8x8xf32> to vector<8xf32>
    %104 = vector.shape_cast %103 : vector<8xf32> to vector<8x1xf32>
    %c2_45 = arith.constant 2 : index
    %c0_46 = arith.constant 0 : index
    %c0_47 = arith.constant 0 : index
    %105 = vector.load %arg20[%c2_45, %c0_46, %c0_47] : memref<4x8x8xbf16, #tpu.memory_space<vmem>>, vector<1x8x8xbf16>
    %106 = vector.shape_cast %105 : vector<1x8x8xbf16> to vector<8x8xbf16>
    %cst_48 = arith.constant dense<0.000000e+00> : vector<8x8xf32>
    %107 = tpu.matmul %101, %106, %cst_48 {dimension_numbers = #tpu.dot_dimension_numbers<[1], [0], [0], [1], [0, 0, 1, 1], [], []>} : vector<8x8xbf16>, vector<8x8xbf16>, vector<8x8xf32> -> vector<8x8xf32>
    %108 = tpu.reciprocal %104 {approx = true} : vector<8x1xf32> -> vector<8x1xf32>
    %109 = vector.broadcast %108 : vector<8x1xf32> to vector<8x8xf32>
    %110 = arith.mulf %107, %109 : vector<8x8xf32>
    %111 = arith.truncf %110 : vector<8x8xf32> to vector<8x8xbf16>
    %112 = vector.extract_strided_slice %38 {offsets = [0, 24], sizes = [8, 8], strides = [1, 1]} : vector<8x32xf32> to vector<8x8xf32>
    %113 = arith.truncf %112 : vector<8x8xf32> to vector<8x8xbf16>
    %c3 = arith.constant 3 : index
    %c0_49 = arith.constant 0 : index
    %c0_50 = arith.constant 0 : index
    %114 = vector.load %arg19[%c3, %c0_49, %c0_50] : memref<4x8x8xbf16, #tpu.memory_space<vmem>>, vector<1x8x8xbf16>
    %115 = vector.shape_cast %114 : vector<1x8x8xbf16> to vector<8x8xbf16>
    %cst_51 = arith.constant dense<0.000000e+00> : vector<8x8xf32>
    %116 = tpu.matmul %113, %115, %cst_51 {dimension_numbers = #tpu.dot_dimension_numbers<[1], [1], [0], [0], [0, 0, 1, 0], [], []>} : vector<8x8xbf16>, vector<8x8xbf16>, vector<8x8xf32> -> vector<8x8xf32>
    %cst_52 = arith.constant -9.99999984E+17 : f32
    %117 = vector.broadcast %cst_52 : f32 to vector<8x8xf32>
    %118 = arith.select %42, %117, %116 : vector<8x8xi1>, vector<8x8xf32>
    %cst_53 = arith.constant dense<0xFF800000> : vector<8xf32>
    %119 = vector.multi_reduction <maximumf>, %118, %cst_53 [1] : vector<8x8xf32> to vector<8xf32>
    %120 = vector.shape_cast %119 : vector<8xf32> to vector<8x1xf32>
    %121 = vector.broadcast %120 : vector<8x1xf32> to vector<8x8xf32>
    %122 = arith.subf %118, %121 : vector<8x8xf32>
    %123 = arith.truncf %122 : vector<8x8xf32> to vector<8x8xbf16>
    %124 = math.exp %123 : vector<8x8xbf16>
    %125 = arith.extf %124 : vector<8x8xbf16> to vector<8x8xf32>
    %cst_54 = arith.constant dense<0.000000e+00> : vector<8xf32>
    %126 = vector.multi_reduction <add>, %125, %cst_54 [1] : vector<8x8xf32> to vector<8xf32>
    %127 = vector.shape_cast %126 : vector<8xf32> to vector<8x1xf32>
    %c3_55 = arith.constant 3 : index
    %c0_56 = arith.constant 0 : index
    %c0_57 = arith.constant 0 : index
    %128 = vector.load %arg20[%c3_55, %c0_56, %c0_57] : memref<4x8x8xbf16, #tpu.memory_space<vmem>>, vector<1x8x8xbf16>
    %129 = vector.shape_cast %128 : vector<1x8x8xbf16> to vector<8x8xbf16>
    %cst_58 = arith.constant dense<0.000000e+00> : vector<8x8xf32>
    %130 = tpu.matmul %124, %129, %cst_58 {dimension_numbers = #tpu.dot_dimension_numbers<[1], [0], [0], [1], [0, 0, 1, 1], [], []>} : vector<8x8xbf16>, vector<8x8xbf16>, vector<8x8xf32> -> vector<8x8xf32>
    %131 = tpu.reciprocal %127 {approx = true} : vector<8x1xf32> -> vector<8x1xf32>
    %132 = vector.broadcast %131 : vector<8x1xf32> to vector<8x8xf32>
    %133 = arith.mulf %130, %132 : vector<8x8xf32>
    %134 = arith.truncf %133 : vector<8x8xf32> to vector<8x8xbf16>
    %135 = tpu.concatenate %65, %88, %111, %134 in 1 : vector<8x8xbf16>, vector<8x8xbf16>, vector<8x8xbf16>, vector<8x8xbf16> -> vector<8x32xbf16>
    %c0_59 = arith.constant 0 : index
    %c0_60 = arith.constant 0 : index
    %136 = vector.load %arg10[%c0_59, %c0_60] : memref<32x32xbf16, #tpu.memory_space<vmem>>, vector<32x32xbf16>
    %cst_61 = arith.constant dense<0.000000e+00> : vector<8x32xf32>
    %137 = tpu.matmul %135, %136, %cst_61 {dimension_numbers = #tpu.dot_dimension_numbers<[1], [0], [0], [1], [0, 0, 1, 1], [], []>} : vector<8x32xbf16>, vector<32x32xbf16>, vector<8x32xf32> -> vector<8x32xf32>
    %c0_62 = arith.constant 0 : index
    %c0_63 = arith.constant 0 : index
    %138 = vector.load %arg11[%c0_62, %c0_63] : memref<1x32xf32, #tpu.memory_space<vmem>>, vector<1x32xf32>
    %139 = vector.broadcast %138 : vector<1x32xf32> to vector<8x32xf32>
    %140 = arith.addf %137, %139 : vector<8x32xf32>
    %141 = arith.addf %140, %7 : vector<8x32xf32>
    %c0_64 = arith.constant 0 : index
    %c0_65 = arith.constant 0 : index
    %142 = vector.load %arg12[%c0_64, %c0_65] : memref<1x32xf32, #tpu.memory_space<vmem>>, vector<1x32xf32>
    %c0_66 = arith.constant 0 : index
    %c0_67 = arith.constant 0 : index
    %143 = vector.load %arg13[%c0_66, %c0_67] : memref<1x32xf32, #tpu.memory_space<vmem>>, vector<1x32xf32>
    %cst_68 = arith.constant dense<0.000000e+00> : vector<8xf32>
    %144 = vector.multi_reduction <add>, %141, %cst_68 [1] : vector<8x32xf32> to vector<8xf32>
    %145 = vector.shape_cast %144 : vector<8xf32> to vector<8x1xf32>
    %cst_69 = arith.constant 3.200000e+01 : f32
    %146 = vector.broadcast %cst_69 : f32 to vector<8x1xf32>
    %147 = arith.divf %145, %146 : vector<8x1xf32>
    %148 = vector.broadcast %147 : vector<8x1xf32> to vector<8x32xf32>
    %149 = arith.subf %141, %148 : vector<8x32xf32>
    %150 = arith.mulf %149, %149 : vector<8x32xf32>
    %cst_70 = arith.constant dense<0.000000e+00> : vector<8xf32>
    %151 = vector.multi_reduction <add>, %150, %cst_70 [1] : vector<8x32xf32> to vector<8xf32>
    %152 = vector.shape_cast %151 : vector<8xf32> to vector<8x1xf32>
    %cst_71 = arith.constant 3.100000e+01 : f32
    %153 = vector.broadcast %cst_71 : f32 to vector<8x1xf32>
    %154 = arith.divf %152, %153 : vector<8x1xf32>
    %155 = math.sqrt %154 : vector<8x1xf32>
    %cst_72 = arith.constant 9.99999997E-7 : f32
    %156 = vector.broadcast %cst_72 : f32 to vector<8x1xf32>
    %157 = arith.addf %155, %156 : vector<8x1xf32>
    %158 = tpu.reciprocal %157 {approx = true} : vector<8x1xf32> -> vector<8x1xf32>
    %159 = vector.broadcast %147 : vector<8x1xf32> to vector<8x32xf32>
    %160 = arith.subf %141, %159 : vector<8x32xf32>
    %161 = vector.broadcast %142 : vector<1x32xf32> to vector<8x32xf32>
    %162 = arith.mulf %161, %160 : vector<8x32xf32>
    %163 = vector.broadcast %158 : vector<8x1xf32> to vector<8x32xf32>
    %164 = arith.mulf %162, %163 : vector<8x32xf32>
    %165 = vector.broadcast %143 : vector<1x32xf32> to vector<8x32xf32>
    %166 = arith.addf %164, %165 : vector<8x32xf32>
    %167 = arith.truncf %166 : vector<8x32xf32> to vector<8x32xbf16>
    %c0_73 = arith.constant 0 : index
    %c0_74 = arith.constant 0 : index
    %168 = vector.load %arg14[%c0_73, %c0_74] : memref<32x64xbf16, #tpu.memory_space<vmem>>, vector<32x64xbf16>
    %cst_75 = arith.constant dense<0.000000e+00> : vector<8x64xf32>
    %169 = tpu.matmul %167, %168, %cst_75 {dimension_numbers = #tpu.dot_dimension_numbers<[1], [0], [0], [1], [0, 0, 1, 1], [], []>} : vector<8x32xbf16>, vector<32x64xbf16>, vector<8x64xf32> -> vector<8x64xf32>
    %c0_76 = arith.constant 0 : index
    %c0_77 = arith.constant 0 : index
    %170 = vector.load %arg15[%c0_76, %c0_77] : memref<1x64xf32, #tpu.memory_space<vmem>>, vector<1x64xf32>
    %171 = vector.broadcast %170 : vector<1x64xf32> to vector<8x64xf32>
    %172 = arith.addf %169, %171 : vector<8x64xf32>
    %cst_78 = arith.constant 0.000000e+00 : f32
    %173 = vector.broadcast %cst_78 : f32 to vector<8x64xf32>
    %174 = arith.maximumf %172, %173 : vector<8x64xf32>
    %175 = arith.truncf %174 : vector<8x64xf32> to vector<8x64xbf16>
    %c0_79 = arith.constant 0 : index
    %c0_80 = arith.constant 0 : index
    %176 = vector.load %arg16[%c0_79, %c0_80] : memref<64x32xbf16, #tpu.memory_space<vmem>>, vector<64x32xbf16>
    %cst_81 = arith.constant dense<0.000000e+00> : vector<8x32xf32>
    %177 = tpu.matmul %175, %176, %cst_81 {dimension_numbers = #tpu.dot_dimension_numbers<[1], [0], [0], [1], [0, 0, 1, 1], [], []>} : vector<8x64xbf16>, vector<64x32xbf16>, vector<8x32xf32> -> vector<8x32xf32>
    %c0_82 = arith.constant 0 : index
    %c0_83 = arith.constant 0 : index
    %178 = vector.load %arg17[%c0_82, %c0_83] : memref<1x32xf32, #tpu.memory_space<vmem>>, vector<1x32xf32>
    %179 = vector.broadcast %178 : vector<1x32xf32> to vector<8x32xf32>
    %180 = arith.addf %177, %179 : vector<8x32xf32>
    %181 = arith.addf %180, %141 : vector<8x32xf32>
    %c0_84 = arith.constant 0 : index
    %c0_85 = arith.constant 0 : index
    %c0_86 = arith.constant 0 : index
    %182 = vector.load %arg18[%c0_84, %c0_85, %c0_86] : memref<1x8x32xf32, #tpu.memory_space<vmem>>, vector<1x8x32xf32>
    %183 = vector.shape_cast %182 : vector<1x8x32xf32> to vector<8x32xf32>
    %184 = vector.shape_cast %181 : vector<8x32xf32> to vector<1x8x32xf32>
    tpu.vector_store %arg18[%c0_84, %c0_85, %c0_86], %184 {strides = array<i32>} : memref<1x8x32xf32, #tpu.memory_space<vmem>>, vector<1x8x32xf32>,
    return
  }
  func.func @transform_0(%arg0: i32, %arg1: i32) -> (i32, i32, i32) {
    %c0_i32 = arith.constant 0 : i32
    %c0_i32_0 = arith.constant 0 : i32
    %c0_i32_1 = arith.constant 0 : i32
    return %arg0, %c0_i32, %c0_i32_0 : i32, i32, i32
  }
  func.func @transform_1(%arg0: i32, %arg1: i32) -> (i32, i32, i32) {
    %c0_i32 = arith.constant 0 : i32
    %c0_i32_0 = arith.constant 0 : i32
    return %arg0, %arg1, %c0_i32 : i32, i32, i32
  }
  func.func @transform_2(%arg0: i32, %arg1: i32) -> (i32, i32) {
    %c0_i32 = arith.constant 0 : i32
    %c0_i32_0 = arith.constant 0 : i32
    %c0_i32_1 = arith.constant 0 : i32
    return %c0_i32, %c0_i32_0 : i32, i32
  }
  func.func @transform_3(%arg0: i32, %arg1: i32) -> (i32, i32) {
    %c0_i32 = arith.constant 0 : i32
    %c0_i32_0 = arith.constant 0 : i32
    %c0_i32_1 = arith.constant 0 : i32
    return %c0_i32, %c0_i32_0 : i32, i32
  }
  func.func @transform_4(%arg0: i32, %arg1: i32) -> (i32, i32) {
    %c0_i32 = arith.constant 0 : i32
    %c0_i32_0 = arith.constant 0 : i32
    %c0_i32_1 = arith.constant 0 : i32
    return %c0_i32, %c0_i32_0 : i32, i32
  }
  func.func @transform_5(%arg0: i32, %arg1: i32) -> (i32, i32) {
    %c0_i32 = arith.constant 0 : i32
    %c0_i32_0 = arith.constant 0 : i32
    %c0_i32_1 = arith.constant 0 : i32
    return %c0_i32, %c0_i32_0 : i32, i32
  }
  func.func @transform_6(%arg0: i32, %arg1: i32) -> (i32, i32) {
    %c0_i32 = arith.constant 0 : i32
    %c0_i32_0 = arith.constant 0 : i32
    %c0_i32_1 = arith.constant 0 : i32
    return %c0_i32, %c0_i32_0 : i32, i32
  }
  func.func @transform_7(%arg0: i32, %arg1: i32) -> (i32, i32) {
    %c0_i32 = arith.constant 0 : i32
    %c0_i32_0 = arith.constant 0 : i32
    %c0_i32_1 = arith.constant 0 : i32
    return %c0_i32, %c0_i32_0 : i32, i32
  }
  func.func @transform_8(%arg0: i32, %arg1: i32) -> (i32, i32) {
    %c0_i32 = arith.constant 0 : i32
    %c0_i32_0 = arith.constant 0 : i32
    %c0_i32_1 = arith.constant 0 : i32
    return %c0_i32, %c0_i32_0 : i32, i32
  }
  func.func @transform_9(%arg0: i32, %arg1: i32) -> (i32, i32) {
    %c0_i32 = arith.constant 0 : i32
    %c0_i32_0 = arith.constant 0 : i32
    %c0_i32_1 = arith.constant 0 : i32
    return %c0_i32, %c0_i32_0 : i32, i32
  }
  func.func @transform_10(%arg0: i32, %arg1: i32) -> (i32, i32) {
    %c0_i32 = arith.constant 0 : i32
    %c0_i32_0 = arith.constant 0 : i32
    %c0_i32_1 = arith.constant 0 : i32
    return %c0_i32, %c0_i32_0 : i32, i32
  }
  func.func @transform_11(%arg0: i32, %arg1: i32) -> (i32, i32) {
    %c0_i32 = arith.constant 0 : i32
    %c0_i32_0 = arith.constant 0 : i32
    %c0_i32_1 = arith.constant 0 : i32
    return %c0_i32, %c0_i32_0 : i32, i32
  }
  func.func @transform_12(%arg0: i32, %arg1: i32) -> (i32, i32) {
    %c0_i32 = arith.constant 0 : i32
    %c0_i32_0 = arith.constant 0 : i32
    %c0_i32_1 = arith.constant 0 : i32
    return %c0_i32, %c0_i32_0 : i32, i32
  }
  func.func @transform_13(%arg0: i32, %arg1: i32) -> (i32, i32) {
    %c0_i32 = arith.constant 0 : i32
    %c0_i32_0 = arith.constant 0 : i32
    %c0_i32_1 = arith.constant 0 : i32
    return %c0_i32, %c0_i32_0 : i32, i32
  }
  func.func @transform_14(%arg0: i32, %arg1: i32) -> (i32, i32) {
    %c0_i32 = arith.constant 0 : i32
    %c0_i32_0 = arith.constant 0 : i32
    %c0_i32_1 = arith.constant 0 : i32
    return %c0_i32, %c0_i32_0 : i32, i32
  }
  func.func @transform_15(%arg0: i32, %arg1: i32) -> (i32, i32) {
    %c0_i32 = arith.constant 0 : i32
    %c0_i32_0 = arith.constant 0 : i32
    %c0_i32_1 = arith.constant 0 : i32
    return %c0_i32, %c0_i32_0 : i32, i32
  }
  func.func @transform_16(%arg0: i32, %arg1: i32) -> (i32, i32, i32) {
    %c0_i32 = arith.constant 0 : i32
    %c0_i32_0 = arith.constant 0 : i32
    return %arg0, %arg1, %c0_i32 : i32, i32, i32
  }
}

</mosaic_0001>

<llo_original>
// kernel: tpu_custom_call.1
$region0: #{tpu_custom_call.1}
  #allocation0 [shape = 'u32[]', space=smem, size = 0x4, offset = 0x4, fixed_abs, tag = 'smem constant byte address 0x4 - core index']
  #allocation1 [shape = 'u32[144,128]{1,0:T(1,128)}', space=vmem, size = 0x12000, scoped, tag = 'internal scratch']
  #allocation2 [shape = 'bf16[4,8,8]{2,1,0:T(8,128)(2,1)}', space=vmem, size = 0x2000, scoped, tag = 'scratch operand']
  #allocation3 [shape = 'bf16[4,8,8]{2,1,0:T(8,128)(2,1)}', space=vmem, size = 0x2000, scoped, tag = 'scratch operand']
  %s0 = inlined_call_operand.vmem [shape: f32[2,8,32], index: 0, kind: input, shape index: {}]
  %s1 = inlined_call_operand.hbm [shape: s8[2,8,8], index: 1, kind: input, shape index: {}]
  %s2 = inlined_call_operand.hbm [shape: f32[1,32], index: 2, kind: input, shape index: {}]
  %s3 = inlined_call_operand.hbm [shape: f32[1,32], index: 3, kind: input, shape index: {}]
  %s4 = inlined_call_operand.vmem [shape: bf16[32,32], index: 4, kind: input, shape index: {}]
  %s5 = inlined_call_operand.hbm [shape: f32[1,32], index: 5, kind: input, shape index: {}]
  %s6 = inlined_call_operand.vmem [shape: bf16[32,64], index: 6, kind: input, shape index: {}]
  %s7 = inlined_call_operand.hbm [shape: f32[1,64], index: 7, kind: input, shape index: {}]
  %s8 = inlined_call_operand.hbm [shape: bf16[32,32], index: 8, kind: input, shape index: {}]
  %s9 = inlined_call_operand.hbm [shape: f32[1,32], index: 9, kind: input, shape index: {}]
  %s10 = inlined_call_operand.vmem [shape: f32[1,32], index: 10, kind: input, shape index: {}]
  %s11 = inlined_call_operand.vmem [shape: f32[1,32], index: 11, kind: input, shape index: {}]
  %s12 = inlined_call_operand.vmem [shape: bf16[32,64], index: 12, kind: input, shape index: {}]
  %s13 = inlined_call_operand.vmem [shape: f32[1,64], index: 13, kind: input, shape index: {}]
  %s14 = inlined_call_operand.vmem [shape: bf16[64,32], index: 14, kind: input, shape index: {}]
  %s15 = inlined_call_operand.vmem [shape: f32[1,32], index: 15, kind: input, shape index: {}]
  %s16 = inlined_call_operand.hbm [shape: f32[2,8,32], index: 16, kind: output, shape index: {}]
  %s17 = sld [smem:[#allocation0]]
  $region129: #{tpu_custom_call.1} parent=0
    _
  %s19 = ssub.s32 1, %s17
  %s20 = scalar_select 0, %s19, %s17
  $region1: #{tpu_custom_call.1} parent=0
    #allocation4 [shape = 'u8[2048]{0}', space=vmem, size = 0x800, scoped, tag = 'input window, operand 1']
    #allocation5 [shape = 's32[2]{0}', space=sflag, size = 0x8, scoped, tag = 'scoped memory for tpu_custom_call.1']
    #allocation6 [shape = 's32[2]{0}', space=sflag, size = 0x8, scoped, tag = 'scoped memory for tpu_custom_call.1']
    #allocation7 [shape = 'u8[512]{0}', space=vmem, size = 0x400, scoped, tag = 'input window, operand 2, single buffered']
    #allocation8 [shape = 's32[1]{0}', space=sflag, size = 0x4, scoped, tag = 'scoped memory for tpu_custom_call.1']
    #allocation9 [shape = 'u8[512]{0}', space=vmem, size = 0x400, scoped, tag = 'input window, operand 3, single buffered']
    #allocation10 [shape = 'u8[512]{0}', space=vmem, size = 0x400, scoped, tag = 'input window, operand 5, single buffered']
    #allocation11 [shape = 's32[1]{0}', space=sflag, size = 0x4, scoped, tag = 'scoped memory for tpu_custom_call.1']
    #allocation12 [shape = 'u8[512]{0}', space=vmem, size = 0x400, scoped, tag = 'input window, operand 7, single buffered']
    #allocation13 [shape = 'u8[8192]{0}', space=vmem, size = 0x2000, scoped, tag = 'input window, operand 8, single buffered']
    #allocation14 [shape = 's32[1]{0}', space=sflag, size = 0x4, scoped, tag = 'scoped memory for tpu_custom_call.1']
    #allocation15 [shape = 'u8[512]{0}', space=vmem, size = 0x400, scoped, tag = 'input window, operand 9, single buffered']
    #allocation16 [shape = 'u8[8192]{0}', space=vmem, size = 0x2000, scoped, tag = 'output window, operand 0']
    %21 = vsyncpa [#allocation5], 0
    %s22 = scalar_lea.sflag [#allocation5], 1
    %23 = vsyncpa %s22, 0
    %24 = vsyncpa [#allocation8], 0
    %25 = vsyncpa [#allocation11], 0
    %26 = vsyncpa [#allocation14], 0
    %27 = vsyncpa [#allocation6], 0
    %s28 = scalar_lea.sflag [#allocation6], 1
    %29 = vsyncpa %s28, 0
    loop: start=0, step=1, limit=4
    $region2: #{tpu_custom_call.1} parent=1 // loop_pre_header
      _
    $region3: #{tpu_custom_call.1} parent=1 // loop_header
      %s31 = sphi 0, %s35
      %p32 = scmp.ge.s32.totalorder %s31, 4
      %s38 = sphi 0, %s50
      %s39 = sphi 0, %s46
      %s40 = sphi 0, %s38
      %s41 = sphi 0, %s39
      %s42 = sphi 0, %s40
      %s43 = sphi 0, %s41
      %s53 = sphi 0, %s55
      %s56 = sphi 0, %s53
      %s57 = sphi 0, %s56
      %s73 = sphi 0, %s57
      %s81 = sphi 0, %s83
      %s84 = sphi 0, %s81
      %s85 = sphi 0, %s84
      %s101 = sphi 0, %s85
      %s105 = sphi 0, %s105
      %s107 = sphi 0, %s105
      %s108 = sphi 0, %s107
      %s122 = sphi 0, %s108
      %s126 = sphi 0, %s126
      %s128 = sphi 0, %s126
      %s129 = sphi 0, %s128
      %s143 = sphi 0, %s129
      %s147 = sphi 0, %s147
      %s149 = sphi 0, %s147
      %s150 = sphi 0, %s149
      %s164 = sphi 0, %s150
      %s168 = sphi 0, %s168
      %s170 = sphi 0, %s168
      %s171 = sphi 0, %s170
      %s185 = sphi 0, %s171
      %s189 = sphi 0, %s189
      %s191 = sphi 0, %s189
      %s192 = sphi 0, %s191
      %s206 = sphi 0, %s192
      %s210 = sphi 0, %s210
      %s212 = sphi 0, %s210
      %s213 = sphi 0, %s212
      %s227 = sphi 0, %s213
      %s231 = sphi 0, %s231
      %s233 = sphi 0, %s231
      %s234 = sphi 0, %s233
      %s248 = sphi 0, %s234
      %s252 = sphi 0, %s252
      %s254 = sphi 0, %s252
      %s255 = sphi 0, %s254
      %s269 = sphi 0, %s255
      %s273 = sphi 0, %s273
      %s275 = sphi 0, %s273
      %s276 = sphi 0, %s275
      %s290 = sphi 0, %s276
      %s294 = sphi 0, %s294
      %s296 = sphi 0, %s294
      %s297 = sphi 0, %s296
      %s311 = sphi 0, %s297
      %s315 = sphi 0, %s315
      %s317 = sphi 0, %s315
      %s318 = sphi 0, %s317
      %s332 = sphi 0, %s318
      %s336 = sphi 0, %s336
      %s338 = sphi 0, %s336
      %s339 = sphi 0, %s338
      %s353 = sphi 0, %s339
      %s357 = sphi 0, %s357
      %s359 = sphi 0, %s357
      %s360 = sphi 0, %s359
      %s374 = sphi 0, %s360
      %s378 = sphi 0, %s378
      %s380 = sphi 0, %s378
      %s381 = sphi 0, %s380
      %s395 = sphi 0, %s381
      %s403 = sphi 0, %s405
      %s406 = sphi 0, %s403
      %s407 = sphi 0, %s406
      %s423 = sphi 0, %s407
    $region4: #{tpu_custom_call.1} parent=1 // loop_header_branch
      %34 = sbr.rel (%p32) target = $region8
    $region5: #{tpu_custom_call.1} parent=1 // loop_body
      %s36 = ssub.s32 %s31, 1
      %s37 = ssub.s32 %s31, 2
      %s44 = sadd.s32 1, %s39
      %p45 = scmp.ge.s32.totalorder %s44, 1
      %s46 = scalar_select %p45, 0, %s44
      %s47 = sadd.s32 1, %s38
      %s48 = scalar_select %p45, %s47, %s38
      %p49 = scmp.ge.s32.totalorder %s48, 2
      %s50 = scalar_select %p49, 0, %s48
      %s51 = ssub.s32 %s38, %s50
      %p52 = scmp.eq.s32.totalorder %s51, 0
      %s54 = sadd.s32 %s53, 1
      %s55 = scalar_select %p52, %s53, %s54
      %p58 = pneg %p52
      %p59 = scmp.eq.s32.totalorder %s31, 1
      %p60 = por %p58, %p59
      %p61 = scmp.ne.s32.totalorder %s53, %s56
      %p62 = scmp.eq.s32.totalorder %s31, 0
      %p63 = por %p61, %p62
      %p64 = scmp.ne.s32.totalorder %s53, %s56
      %p65 = scmp.eq.s32.totalorder %s36, 1
      %p66 = por %p64, %p65
      %p67 = scmp.ne.s32.totalorder %s56, %s57
      %p68 = scmp.eq.s32.totalorder %s36, 0
      %p69 = por %p67, %p68
      %p70 = scmp.ne.s32.totalorder %s56, %s57
      %p71 = scmp.eq.s32.totalorder %s37, 1
      %p72 = por %p70, %p71
      %p74 = scmp.ne.s32.totalorder %s57, %s73
      %p75 = scmp.eq.s32.totalorder %s37, 0
      %p76 = por %p74, %p75
      %s77 = ssub.s32 %s38, %s50
      %s78 = ssub.s32 %s39, %s46
      %s79 = sor.u32 %s77, %s78
      %p80 = scmp.eq.s32.totalorder %s79, 0
      %s82 = sadd.s32 %s81, 1
      %s83 = scalar_select %p80, %s81, %s82
      %p86 = pneg %p80
      %p87 = scmp.eq.s32.totalorder %s31, 1
      %p88 = por %p86, %p87
      %p89 = scmp.ne.s32.totalorder %s81, %s84
      %p90 = scmp.eq.s32.totalorder %s31, 0
      %p91 = por %p89, %p90
      %p92 = scmp.ne.s32.totalorder %s81, %s84
      %p93 = scmp.eq.s32.totalorder %s36, 1
      %p94 = por %p92, %p93
      %p95 = scmp.ne.s32.totalorder %s84, %s85
      %p96 = scmp.eq.s32.totalorder %s36, 0
      %p97 = por %p95, %p96
      %p98 = scmp.ne.s32.totalorder %s84, %s85
      %p99 = scmp.eq.s32.totalorder %s37, 1
      %p100 = por %p98, %p99
      %p102 = scmp.ne.s32.totalorder %s85, %s101
      %p103 = scmp.eq.s32.totalorder %s37, 0
      %p104 = por %p102, %p103
      %s106 = sadd.s32 %s105, 1
      %p109 = scmp.eq.s32.totalorder %s31, 1
      %p110 = scmp.ne.s32.totalorder %s105, %s107
      %p111 = scmp.eq.s32.totalorder %s31, 0
      %p112 = por %p110, %p111
      %p113 = scmp.ne.s32.totalorder %s105, %s107
      %p114 = scmp.eq.s32.totalorder %s36, 1
      %p115 = por %p113, %p114
      %p116 = scmp.ne.s32.totalorder %s107, %s108
      %p117 = scmp.eq.s32.totalorder %s36, 0
      %p118 = por %p116, %p117
      %p119 = scmp.ne.s32.totalorder %s107, %s108
      %p120 = scmp.eq.s32.totalorder %s37, 1
      %p121 = por %p119, %p120
      %p123 = scmp.ne.s32.totalorder %s108, %s122
      %p124 = scmp.eq.s32.totalorder %s37, 0
      %p125 = por %p123, %p124
      %s127 = sadd.s32 %s126, 1
      %p130 = scmp.eq.s32.totalorder %s31, 1
      %p131 = scmp.ne.s32.totalorder %s126, %s128
      %p132 = scmp.eq.s32.totalorder %s31, 0
      %p133 = por %p131, %p132
      %p134 = scmp.ne.s32.totalorder %s126, %s128
      %p135 = scmp.eq.s32.totalorder %s36, 1
      %p136 = por %p134, %p135
      %p137 = scmp.ne.s32.totalorder %s128, %s129
      %p138 = scmp.eq.s32.totalorder %s36, 0
      %p139 = por %p137, %p138
      %p140 = scmp.ne.s32.totalorder %s128, %s129
      %p141 = scmp.eq.s32.totalorder %s37, 1
      %p142 = por %p140, %p141
      %p144 = scmp.ne.s32.totalorder %s129, %s143
      %p145 = scmp.eq.s32.totalorder %s37, 0
      %p146 = por %p144, %p145
      %s148 = sadd.s32 %s147, 1
      %p151 = scmp.eq.s32.totalorder %s31, 1
      %p152 = scmp.ne.s32.totalorder %s147, %s149
      %p153 = scmp.eq.s32.totalorder %s31, 0
      %p154 = por %p152, %p153
      %p155 = scmp.ne.s32.totalorder %s147, %s149
      %p156 = scmp.eq.s32.totalorder %s36, 1
      %p157 = por %p155, %p156
      %p158 = scmp.ne.s32.totalorder %s149, %s150
      %p159 = scmp.eq.s32.totalorder %s36, 0
      %p160 = por %p158, %p159
      %p161 = scmp.ne.s32.totalorder %s149, %s150
      %p162 = scmp.eq.s32.totalorder %s37, 1
      %p163 = por %p161, %p162
      %p165 = scmp.ne.s32.totalorder %s150, %s164
      %p166 = scmp.eq.s32.totalorder %s37, 0
      %p167 = por %p165, %p166
      %s169 = sadd.s32 %s168, 1
      %p172 = scmp.eq.s32.totalorder %s31, 1
      %p173 = scmp.ne.s32.totalorder %s168, %s170
      %p174 = scmp.eq.s32.totalorder %s31, 0
      %p175 = por %p173, %p174
      %p176 = scmp.ne.s32.totalorder %s168, %s170
      %p177 = scmp.eq.s32.totalorder %s36, 1
      %p178 = por %p176, %p177
      %p179 = scmp.ne.s32.totalorder %s170, %s171
      %p180 = scmp.eq.s32.totalorder %s36, 0
      %p181 = por %p179, %p180
      %p182 = scmp.ne.s32.totalorder %s170, %s171
      %p183 = scmp.eq.s32.totalorder %s37, 1
      %p184 = por %p182, %p183
      %p186 = scmp.ne.s32.totalorder %s171, %s185
      %p187 = scmp.eq.s32.totalorder %s37, 0
      %p188 = por %p186, %p187
      %s190 = sadd.s32 %s189, 1
      %p193 = scmp.eq.s32.totalorder %s31, 1
      %p194 = scmp.ne.s32.totalorder %s189, %s191
      %p195 = scmp.eq.s32.totalorder %s31, 0
      %p196 = por %p194, %p195
      %p197 = scmp.ne.s32.totalorder %s189, %s191
      %p198 = scmp.eq.s32.totalorder %s36, 1
      %p199 = por %p197, %p198
      %p200 = scmp.ne.s32.totalorder %s191, %s192
      %p201 = scmp.eq.s32.totalorder %s36, 0
      %p202 = por %p200, %p201
      %p203 = scmp.ne.s32.totalorder %s191, %s192
      %p204 = scmp.eq.s32.totalorder %s37, 1
      %p205 = por %p203, %p204
      %p207 = scmp.ne.s32.totalorder %s192, %s206
      %p208 = scmp.eq.s32.totalorder %s37, 0
      %p209 = por %p207, %p208
      %s211 = sadd.s32 %s210, 1
      %p214 = scmp.eq.s32.totalorder %s31, 1
      %p215 = scmp.ne.s32.totalorder %s210, %s212
      %p216 = scmp.eq.s32.totalorder %s31, 0
      %p217 = por %p215, %p216
      %p218 = scmp.ne.s32.totalorder %s210, %s212
      %p219 = scmp.eq.s32.totalorder %s36, 1
      %p220 = por %p218, %p219
      %p221 = scmp.ne.s32.totalorder %s212, %s213
      %p222 = scmp.eq.s32.totalorder %s36, 0
      %p223 = por %p221, %p222
      %p224 = scmp.ne.s32.totalorder %s212, %s213
      %p225 = scmp.eq.s32.totalorder %s37, 1
      %p226 = por %p224, %p225
      %p228 = scmp.ne.s32.totalorder %s213, %s227
      %p229 = scmp.eq.s32.totalorder %s37, 0
      %p230 = por %p228, %p229
      %s232 = sadd.s32 %s231, 1
      %p235 = scmp.eq.s32.totalorder %s31, 1
      %p236 = scmp.ne.s32.totalorder %s231, %s233
      %p237 = scmp.eq.s32.totalorder %s31, 0
      %p238 = por %p236, %p237
      %p239 = scmp.ne.s32.totalorder %s231, %s233
      %p240 = scmp.eq.s32.totalorder %s36, 1
      %p241 = por %p239, %p240
      %p242 = scmp.ne.s32.totalorder %s233, %s234
      %p243 = scmp.eq.s32.totalorder %s36, 0
      %p244 = por %p242, %p243
      %p245 = scmp.ne.s32.totalorder %s233, %s234
      %p246 = scmp.eq.s32.totalorder %s37, 1
      %p247 = por %p245, %p246
      %p249 = scmp.ne.s32.totalorder %s234, %s248
      %p250 = scmp.eq.s32.totalorder %s37, 0
      %p251 = por %p249, %p250
      %s253 = sadd.s32 %s252, 1
      %p256 = scmp.eq.s32.totalorder %s31, 1
      %p257 = scmp.ne.s32.totalorder %s252, %s254
      %p258 = scmp.eq.s32.totalorder %s31, 0
      %p259 = por %p257, %p258
      %p260 = scmp.ne.s32.totalorder %s252, %s254
      %p261 = scmp.eq.s32.totalorder %s36, 1
      %p262 = por %p260, %p261
      %p263 = scmp.ne.s32.totalorder %s254, %s255
      %p264 = scmp.eq.s32.totalorder %s36, 0
      %p265 = por %p263, %p264
      %p266 = scmp.ne.s32.totalorder %s254, %s255
      %p267 = scmp.eq.s32.totalorder %s37, 1
      %p268 = por %p266, %p267
      %p270 = scmp.ne.s32.totalorder %s255, %s269
      %p271 = scmp.eq.s32.totalorder %s37, 0
      %p272 = por %p270, %p271
      %s274 = sadd.s32 %s273, 1
      %p277 = scmp.eq.s32.totalorder %s31, 1
      %p278 = scmp.ne.s32.totalorder %s273, %s275
      %p279 = scmp.eq.s32.totalorder %s31, 0
      %p280 = por %p278, %p279
      %p281 = scmp.ne.s32.totalorder %s273, %s275
      %p282 = scmp.eq.s32.totalorder %s36, 1
      %p283 = por %p281, %p282
      %p284 = scmp.ne.s32.totalorder %s275, %s276
      %p285 = scmp.eq.s32.totalorder %s36, 0
      %p286 = por %p284, %p285
      %p287 = scmp.ne.s32.totalorder %s275, %s276
      %p288 = scmp.eq.s32.totalorder %s37, 1
      %p289 = por %p287, %p288
      %p291 = scmp.ne.s32.totalorder %s276, %s290
      %p292 = scmp.eq.s32.totalorder %s37, 0
      %p293 = por %p291, %p292
      %s295 = sadd.s32 %s294, 1
      %p298 = scmp.eq.s32.totalorder %s31, 1
      %p299 = scmp.ne.s32.totalorder %s294, %s296
      %p300 = scmp.eq.s32.totalorder %s31, 0
      %p301 = por %p299, %p300
      %p302 = scmp.ne.s32.totalorder %s294, %s296
      %p303 = scmp.eq.s32.totalorder %s36, 1
      %p304 = por %p302, %p303
      %p305 = scmp.ne.s32.totalorder %s296, %s297
      %p306 = scmp.eq.s32.totalorder %s36, 0
      %p307 = por %p305, %p306
      %p308 = scmp.ne.s32.totalorder %s296, %s297
      %p309 = scmp.eq.s32.totalorder %s37, 1
      %p310 = por %p308, %p309
      %p312 = scmp.ne.s32.totalorder %s297, %s311
      %p313 = scmp.eq.s32.totalorder %s37, 0
      %p314 = por %p312, %p313
      %s316 = sadd.s32 %s315, 1
      %p319 = scmp.eq.s32.totalorder %s31, 1
      %p320 = scmp.ne.s32.totalorder %s315, %s317
      %p321 = scmp.eq.s32.totalorder %s31, 0
      %p322 = por %p320, %p321
      %p323 = scmp.ne.s32.totalorder %s315, %s317
      %p324 = scmp.eq.s32.totalorder %s36, 1
      %p325 = por %p323, %p324
      %p326 = scmp.ne.s32.totalorder %s317, %s318
      %p327 = scmp.eq.s32.totalorder %s36, 0
      %p328 = por %p326, %p327
      %p329 = scmp.ne.s32.totalorder %s317, %s318
      %p330 = scmp.eq.s32.totalorder %s37, 1
      %p331 = por %p329, %p330
      %p333 = scmp.ne.s32.totalorder %s318, %s332
      %p334 = scmp.eq.s32.totalorder %s37, 0
      %p335 = por %p333, %p334
      %s337 = sadd.s32 %s336, 1
      %p340 = scmp.eq.s32.totalorder %s31, 1
      %p341 = scmp.ne.s32.totalorder %s336, %s338
      %p342 = scmp.eq.s32.totalorder %s31, 0
      %p343 = por %p341, %p342
      %p344 = scmp.ne.s32.totalorder %s336, %s338
      %p345 = scmp.eq.s32.totalorder %s36, 1
      %p346 = por %p344, %p345
      %p347 = scmp.ne.s32.totalorder %s338, %s339
      %p348 = scmp.eq.s32.totalorder %s36, 0
      %p349 = por %p347, %p348
      %p350 = scmp.ne.s32.totalorder %s338, %s339
      %p351 = scmp.eq.s32.totalorder %s37, 1
      %p352 = por %p350, %p351
      %p354 = scmp.ne.s32.totalorder %s339, %s353
      %p355 = scmp.eq.s32.totalorder %s37, 0
      %p356 = por %p354, %p355
      %s358 = sadd.s32 %s357, 1
      %p361 = scmp.eq.s32.totalorder %s31, 1
      %p362 = scmp.ne.s32.totalorder %s357, %s359
      %p363 = scmp.eq.s32.totalorder %s31, 0
      %p364 = por %p362, %p363
      %p365 = scmp.ne.s32.totalorder %s357, %s359
      %p366 = scmp.eq.s32.totalorder %s36, 1
      %p367 = por %p365, %p366
      %p368 = scmp.ne.s32.totalorder %s359, %s360
      %p369 = scmp.eq.s32.totalorder %s36, 0
      %p370 = por %p368, %p369
      %p371 = scmp.ne.s32.totalorder %s359, %s360
      %p372 = scmp.eq.s32.totalorder %s37, 1
      %p373 = por %p371, %p372
      %p375 = scmp.ne.s32.totalorder %s360, %s374
      %p376 = scmp.eq.s32.totalorder %s37, 0
      %p377 = por %p375, %p376
      %s379 = sadd.s32 %s378, 1
      %p382 = scmp.eq.s32.totalorder %s31, 1
      %p383 = scmp.ne.s32.totalorder %s378, %s380
      %p384 = scmp.eq.s32.totalorder %s31, 0
      %p385 = por %p383, %p384
      %p386 = scmp.ne.s32.totalorder %s378, %s380
      %p387 = scmp.eq.s32.totalorder %s36, 1
      %p388 = por %p386, %p387
      %p389 = scmp.ne.s32.totalorder %s380, %s381
      %p390 = scmp.eq.s32.totalorder %s36, 0
      %p391 = por %p389, %p390
      %p392 = scmp.ne.s32.totalorder %s380, %s381
      %p393 = scmp.eq.s32.totalorder %s37, 1
      %p394 = por %p392, %p393
      %p396 = scmp.ne.s32.totalorder %s381, %s395
      %p397 = scmp.eq.s32.totalorder %s37, 0
      %p398 = por %p396, %p397
      %s399 = ssub.s32 %s38, %s50
      %s400 = ssub.s32 %s39, %s46
      %s401 = sor.u32 %s399, %s400
      %p402 = scmp.eq.s32.totalorder %s401, 0
      %s404 = sadd.s32 %s403, 1
      %s405 = scalar_select %p402, %s403, %s404
      %p408 = pneg %p402
      %p409 = scmp.eq.s32.totalorder %s31, 1
      %p410 = por %p408, %p409
      %p411 = scmp.ne.s32.totalorder %s403, %s406
      %p412 = scmp.eq.s32.totalorder %s31, 0
      %p413 = por %p411, %p412
      %p414 = scmp.ne.s32.totalorder %s403, %s406
      %p415 = scmp.eq.s32.totalorder %s36, 1
      %p416 = por %p414, %p415
      %p417 = scmp.ne.s32.totalorder %s406, %s407
      %p418 = scmp.eq.s32.totalorder %s36, 0
      %p419 = por %p417, %p418
      %p420 = scmp.ne.s32.totalorder %s406, %s407
      %p421 = scmp.eq.s32.totalorder %s37, 1
      %p422 = por %p420, %p421
      %p424 = scmp.ne.s32.totalorder %s407, %s423
      %p425 = scmp.eq.s32.totalorder %s37, 0
      %p426 = por %p424, %p425
      %p427 = scmp.le.s32.totalorder 1, %s31
      %p428 = scmp.lt.s32.totalorder %s31, 3
      %p429 = pnand %p427, %p428
      %p430 = pneg %p429
      // Predicated region
      $region9: #{tpu_custom_call.1} parent=5 // pred_check
        _
      $region10: #{tpu_custom_call.1} parent=5 // pred_check_branch
        %432 = sbr.rel (%p429) target = $region12
      $region11: #{tpu_custom_call.1} parent=5 // pred_region
        %s433 = ssub.s32 %s31, 1
        // Predicated region
        $region13: #{tpu_custom_call.1} parent=11 // pred_check
          %p434 = pneg %p118
        $region14: #{tpu_custom_call.1} parent=11 // pred_check_branch
          %436 = sbr.rel (%p434) target = $region16
        $region15: #{tpu_custom_call.1} parent=11 // pred_region
          %s438 = ssub.s32 16, 16
          %439 = vsyncadd [#allocation8], %s438
          %s441 = sshll.u32 [#allocation7], 4
          %s442 = int_to_ptr.vmem [resolvable:$true] %s441
          %444 = dma.hbm_to_vmem [thread:$0]  %s2, 16, %s442, [#allocation8]
        $region16: #{tpu_custom_call.1} parent=11 // pred_fallthru
          _
        // Predicated region
        $region17: #{tpu_custom_call.1} parent=11 // pred_check
          %p445 = pneg %p139
        $region18: #{tpu_custom_call.1} parent=11 // pred_check_branch
          %447 = sbr.rel (%p445) target = $region20
        $region19: #{tpu_custom_call.1} parent=11 // pred_region
          %s449 = ssub.s32 16, 16
          %450 = vsyncadd [#allocation8], %s449
          %s452 = sshll.u32 [#allocation9], 4
          %s453 = int_to_ptr.vmem [resolvable:$true] %s452
          %455 = dma.hbm_to_vmem [thread:$0]  %s3, 16, %s453, [#allocation8]
        $region20: #{tpu_custom_call.1} parent=11 // pred_fallthru
          _
        // Predicated region
        $region21: #{tpu_custom_call.1} parent=11 // pred_check
          %p456 = pneg %p160
        $region22: #{tpu_custom_call.1} parent=11 // pred_check_branch
          %458 = sbr.rel (%p456) target = $region24
        $region23: #{tpu_custom_call.1} parent=11 // pred_region
          _
        $region24: #{tpu_custom_call.1} parent=11 // pred_fallthru
          _
        // Predicated region
        $region25: #{tpu_custom_call.1} parent=11 // pred_check
          %p459 = pneg %p181
        $region26: #{tpu_custom_call.1} parent=11 // pred_check_branch
          %461 = sbr.rel (%p459) target = $region28
        $region27: #{tpu_custom_call.1} parent=11 // pred_region
          %s463 = ssub.s32 16, 16
          %464 = vsyncadd [#allocation11], %s463
          %s466 = sshll.u32 [#allocation10], 4
          %s467 = int_to_ptr.vmem [resolvable:$true] %s466
          %469 = dma.hbm_to_vmem [thread:$0]  %s5, 16, %s467, [#allocation11]
        $region28: #{tpu_custom_call.1} parent=11 // pred_fallthru
          _
        // Predicated region
        $region29: #{tpu_custom_call.1} parent=11 // pred_check
          %p470 = pneg %p202
        $region30: #{tpu_custom_call.1} parent=11 // pred_check_branch
          %472 = sbr.rel (%p470) target = $region32
        $region31: #{tpu_custom_call.1} parent=11 // pred_region
          _
        $region32: #{tpu_custom_call.1} parent=11 // pred_fallthru
          _
        // Predicated region
        $region33: #{tpu_custom_call.1} parent=11 // pred_check
          %p473 = pneg %p223
        $region34: #{tpu_custom_call.1} parent=11 // pred_check_branch
          %475 = sbr.rel (%p473) target = $region36
        $region35: #{tpu_custom_call.1} parent=11 // pred_region
          %s477 = ssub.s32 16, 16
          %478 = vsyncadd [#allocation11], %s477
          %s480 = sshll.u32 [#allocation12], 4
          %s481 = int_to_ptr.vmem [resolvable:$true] %s480
          %483 = dma.hbm_to_vmem [thread:$0]  %s7, 16, %s481, [#allocation11]
        $region36: #{tpu_custom_call.1} parent=11 // pred_fallthru
          _
        // Predicated region
        $region37: #{tpu_custom_call.1} parent=11 // pred_check
          %p484 = pneg %p244
        $region38: #{tpu_custom_call.1} parent=11 // pred_check_branch
          %486 = sbr.rel (%p484) target = $region40
        $region39: #{tpu_custom_call.1} parent=11 // pred_region
          %s488 = ssub.s32 256, 256
          %489 = vsyncadd [#allocation14], %s488
          %s490 = sshll.u32 [#allocation13], 4
          %s491 = int_to_ptr.vmem [resolvable:$true] %s490
          %496 = dma.hbm_to_vmem [thread:$0]  %s8, 256, %s491, [#allocation14], 64, 64, 4
        $region40: #{tpu_custom_call.1} parent=11 // pred_fallthru
          _
        // Predicated region
        $region41: #{tpu_custom_call.1} parent=11 // pred_check
          %p497 = pneg %p265
        $region42: #{tpu_custom_call.1} parent=11 // pred_check_branch
          %499 = sbr.rel (%p497) target = $region44
        $region43: #{tpu_custom_call.1} parent=11 // pred_region
          %s501 = ssub.s32 16, 16
          %502 = vsyncadd [#allocation14], %s501
          %s504 = sshll.u32 [#allocation15], 4
          %s505 = int_to_ptr.vmem [resolvable:$true] %s504
          %507 = dma.hbm_to_vmem [thread:$0]  %s9, 16, %s505, [#allocation14]
        $region44: #{tpu_custom_call.1} parent=11 // pred_fallthru
          _
        // Predicated region
        $region45: #{tpu_custom_call.1} parent=11 // pred_check
          %p508 = pneg %p286
        $region46: #{tpu_custom_call.1} parent=11 // pred_check_branch
          %510 = sbr.rel (%p508) target = $region48
        $region47: #{tpu_custom_call.1} parent=11 // pred_region
          _
        $region48: #{tpu_custom_call.1} parent=11 // pred_fallthru
          _
        // Predicated region
        $region49: #{tpu_custom_call.1} parent=11 // pred_check
          %p511 = pneg %p307
        $region50: #{tpu_custom_call.1} parent=11 // pred_check_branch
          %513 = sbr.rel (%p511) target = $region52
        $region51: #{tpu_custom_call.1} parent=11 // pred_region
          _
        $region52: #{tpu_custom_call.1} parent=11 // pred_fallthru
          _
        // Predicated region
        $region53: #{tpu_custom_call.1} parent=11 // pred_check
          %p514 = pneg %p328
        $region54: #{tpu_custom_call.1} parent=11 // pred_check_branch
          %516 = sbr.rel (%p514) target = $region56
        $region55: #{tpu_custom_call.1} parent=11 // pred_region
          _
        $region56: #{tpu_custom_call.1} parent=11 // pred_fallthru
          _
        // Predicated region
        $region57: #{tpu_custom_call.1} parent=11 // pred_check
          %p517 = pneg %p349
        $region58: #{tpu_custom_call.1} parent=11 // pred_check_branch
          %519 = sbr.rel (%p517) target = $region60
        $region59: #{tpu_custom_call.1} parent=11 // pred_region
          _
        $region60: #{tpu_custom_call.1} parent=11 // pred_fallthru
          _
        // Predicated region
        $region61: #{tpu_custom_call.1} parent=11 // pred_check
          %p520 = pneg %p370
        $region62: #{tpu_custom_call.1} parent=11 // pred_check_branch
          %522 = sbr.rel (%p520) target = $region64
        $region63: #{tpu_custom_call.1} parent=11 // pred_region
          _
        $region64: #{tpu_custom_call.1} parent=11 // pred_fallthru
          _
        // Predicated region
        $region65: #{tpu_custom_call.1} parent=11 // pred_check
          %p523 = pneg %p391
        $region66: #{tpu_custom_call.1} parent=11 // pred_check_branch
          %525 = sbr.rel (%p523) target = $region68
        $region67: #{tpu_custom_call.1} parent=11 // pred_region
          _
        $region68: #{tpu_custom_call.1} parent=11 // pred_fallthru
          _
      $region12: #{tpu_custom_call.1} parent=5 // pred_fallthru
        _
      %p526 = scmp.lt.s32.totalorder %s31, 2
      // Predicated region
      $region69: #{tpu_custom_call.1} parent=5 // pred_check
        %p527 = pneg %p526
      $region70: #{tpu_custom_call.1} parent=5 // pred_check_branch
        %529 = sbr.rel (%p527) target = $region72
      $region71: #{tpu_custom_call.1} parent=5 // pred_region
        // Predicated region
        $region73: #{tpu_custom_call.1} parent=71 // pred_check
          %p530 = pneg %p63
        $region74: #{tpu_custom_call.1} parent=71 // pred_check_branch
          %532 = sbr.rel (%p530) target = $region76
        $region75: #{tpu_custom_call.1} parent=71 // pred_region
          %p533 = scmp.lt.s32.totalorder %s38, 1
          %s534 = scalar_select %p533, %s38, 1
          %s535 = smul.addr %s534, 8
          %s536 = scalar_lea.vmem %s0, %s535
        $region76: #{tpu_custom_call.1} parent=71 // pred_fallthru
          _
        // Predicated region
        $region77: #{tpu_custom_call.1} parent=71 // pred_check
          %p537 = pneg %p91
        $region78: #{tpu_custom_call.1} parent=71 // pred_check_branch
          %539 = sbr.rel (%p537) target = $region80
        $region79: #{tpu_custom_call.1} parent=71 // pred_region
          %s540 = sand.u32 %s81, 1
          %s541 = scalar_lea.sflag [#allocation5], %s540
          %s542 = sand.u32 %s81, 1
          %s543 = smul.addr %s542, 2
          %s544 = scalar_lea.vmem [#allocation4], %s543
          %s546 = ssub.s32 32, 32
          %547 = vsyncadd %s541, %s546
          %s548 = sadd.s32 %s39, %s38
          %s549 = smul.addr %s548, 32
          %s550 = scalar_lea.hbm %s1, %s549
          %s552 = sshll.u32 %s544, 4
          %s553 = int_to_ptr.vmem [resolvable:$true] %s552
          %555 = dma.hbm_to_vmem [thread:$0]  %s550, 32, %s553, %s541
        $region80: #{tpu_custom_call.1} parent=71 // pred_fallthru
          _
      $region72: #{tpu_custom_call.1} parent=5 // pred_fallthru
        _
      %p556 = scmp.le.s32.totalorder 1, %s31
      %p557 = scmp.lt.s32.totalorder %s31, 3
      %p558 = pnand %p556, %p557
      %p559 = pneg %p558
      // Predicated region
      $region81: #{tpu_custom_call.1} parent=5 // pred_check
        _
      $region82: #{tpu_custom_call.1} parent=5 // pred_check_branch
        %561 = sbr.rel (%p558) target = $region84
      $region83: #{tpu_custom_call.1} parent=5 // pred_region
        %s562 = ssub.s32 %s31, 1
        %s563 = sand.u32 %s84, 1
        %s564 = scalar_lea.sflag [#allocation5], %s563
        %s565 = sand.u32 %s84, 1
        %s566 = smul.addr %s565, 2
        %s567 = scalar_lea.vmem [#allocation4], %s566
        // Predicated region
        $region85: #{tpu_custom_call.1} parent=83 // pred_check
          %p568 = pneg %p97
        $region86: #{tpu_custom_call.1} parent=83 // pred_check_branch
          %570 = sbr.rel (%p568) target = $region88
        $region87: #{tpu_custom_call.1} parent=83 // pred_region
          %571 = dma.done %s564, 32
        $region88: #{tpu_custom_call.1} parent=83 // pred_fallthru
          _
        // Predicated region
        $region89: #{tpu_custom_call.1} parent=83 // pred_check
          %p572 = pneg %p118
        $region90: #{tpu_custom_call.1} parent=83 // pred_check_branch
          %574 = sbr.rel (%p572) target = $region92
        $region91: #{tpu_custom_call.1} parent=83 // pred_region
          %575 = dma.done [#allocation8], 16
        $region92: #{tpu_custom_call.1} parent=83 // pred_fallthru
          _
        // Predicated region
        $region93: #{tpu_custom_call.1} parent=83 // pred_check
          %p576 = pneg %p139
        $region94: #{tpu_custom_call.1} parent=83 // pred_check_branch
          %578 = sbr.rel (%p576) target = $region96
        $region95: #{tpu_custom_call.1} parent=83 // pred_region
          %579 = dma.done [#allocation8], 16
        $region96: #{tpu_custom_call.1} parent=83 // pred_fallthru
          _
        // Predicated region
        $region97: #{tpu_custom_call.1} parent=83 // pred_check
          %p580 = pneg %p181
        $region98: #{tpu_custom_call.1} parent=83 // pred_check_branch
          %582 = sbr.rel (%p580) target = $region100
        $region99: #{tpu_custom_call.1} parent=83 // pred_region
          %583 = dma.done [#allocation11], 16
        $region100: #{tpu_custom_call.1} parent=83 // pred_fallthru
          _
        // Predicated region
        $region101: #{tpu_custom_call.1} parent=83 // pred_check
          %p584 = pneg %p223
        $region102: #{tpu_custom_call.1} parent=83 // pred_check_branch
          %586 = sbr.rel (%p584) target = $region104
        $region103: #{tpu_custom_call.1} parent=83 // pred_region
          %587 = dma.done [#allocation11], 16
        $region104: #{tpu_custom_call.1} parent=83 // pred_fallthru
          _
        // Predicated region
        $region105: #{tpu_custom_call.1} parent=83 // pred_check
          %p588 = pneg %p244
        $region106: #{tpu_custom_call.1} parent=83 // pred_check_branch
          %590 = sbr.rel (%p588) target = $region108
        $region107: #{tpu_custom_call.1} parent=83 // pred_region
          %591 = dma.done [#allocation14], 256
        $region108: #{tpu_custom_call.1} parent=83 // pred_fallthru
          _
        // Predicated region
        $region109: #{tpu_custom_call.1} parent=83 // pred_check
          %p592 = pneg %p265
        $region110: #{tpu_custom_call.1} parent=83 // pred_check_branch
          %594 = sbr.rel (%p592) target = $region112
        $region111: #{tpu_custom_call.1} parent=83 // pred_region
          %595 = dma.done [#allocation14], 16
        $region112: #{tpu_custom_call.1} parent=83 // pred_fallthru
          _
        %p596 = scmp.lt.s32.totalorder %s40, 1
        %s597 = scalar_select %p596, %s40, 1
        %s598 = smul.addr %s597, 8
        %s599 = scalar_lea.vmem %s0, %s598
        %p600 = pneg %p69
        %p601 = pneg %p66
        %s602 = sand.u32 %s84, 1
        %s603 = scalar_lea.sflag [#allocation5], %s602
        %s604 = sand.u32 %s84, 1
        %s605 = smul.addr %s604, 2
        %s606 = scalar_lea.vmem [#allocation4], %s605
        %p607 = pneg %p97
        %p608 = pneg %p94
        %p609 = pneg %p118
        %p610 = pneg %p115
        %p611 = pneg %p139
        %p612 = pneg %p136
        %p613 = pneg %p160
        %p614 = pneg %p157
        %p615 = pneg %p181
        %p616 = pneg %p178
        %p617 = pneg %p202
        %p618 = pneg %p199
        %p619 = pneg %p223
        %p620 = pneg %p220
        %p621 = pneg %p244
        %p622 = pneg %p241
        %p623 = pneg %p265
        %p624 = pneg %p262
        %p625 = pneg %p286
        %p626 = pneg %p283
        %p627 = pneg %p307
        %p628 = pneg %p304
        %p629 = pneg %p328
        %p630 = pneg %p325
        %p631 = pneg %p349
        %p632 = pneg %p346
        %p633 = pneg %p370
        %p634 = pneg %p367
        %p635 = pneg %p391
        %p636 = pneg %p388
        %p637 = pneg %p419
        %p638 = pneg %p416
        %s639 = sand.u32 %s406, 1
        %s640 = scalar_lea.sflag [#allocation6], %s639
        %s641 = sand.u32 %s406, 1
        %s642 = smul.addr %s641, 8
        %s643 = scalar_lea.vmem [#allocation16], %s642
        %p644 = scmp.lt.s32.totalorder %s40, 1
        %s645 = scalar_select %p644, %s40, 1
        %s646 = smul.addr %s645, 8
        %s647 = scalar_lea.vmem %s0, %s646
        %p651 = scmp.eq.s32.totalorder %s41, 0
        // Predicated region
        $region113: #{tpu_custom_call.1} parent=83 // pred_check
          %p652 = pneg %p651
        $region114: #{tpu_custom_call.1} parent=83 // pred_check_branch
          %654 = sbr.rel (%p652) target = $region116
        $region115: #{tpu_custom_call.1} parent=83 // pred_region
          %v655 = vld [vmem:[%s647] sm:$0xff]
          %v656 = vld [vmem:[#allocation7] sm:$0x1]
          %v657 = vld [vmem:[#allocation9] sm:$0x1]
          %vm658 = vcmask 261120
          %v659 = vsel %vm658, %v655, 0.0
          %660 = vadd.xlane.f32.xlu0 %v659
          %v661 = vpop.xlane.xlu0 %660
          %v662 = vrcp.pop 32.0
          %v663 = vmul.f32 %v661, %v662
          %v664 = vsub.f32 %v655, %v663
          %v665 = vmul.f32 %v664, %v664
          %v666 = vsel %vm658, %v665, 0.0
          %667 = vadd.xlane.f32.xlu0 %v666
          %v668 = vpop.xlane.xlu0 %667
          %v669 = vrcp.pop 31.0
          %v670 = vmul.f32 %v668, %v669
          %v671 = vrsqrt.pop %v670
          %v672 = vmul.f32 %v670, %v671
          %vm673 = vcmp.eq.f32.partialorder %v670, inf
          %v674 = vsel %vm673, %v670, %v672
          %vm675 = vcmp.eq.f32.partialorder %v670, 0.0
          %v676 = vand.u32 %v670, 2147483648
          %v677 = vsel %vm675, %v676, %v674
          %v678 = vadd.f32 %v677, 1e-06
          %v679 = vrcp.pop %v678
          %v681 = vlaneseq
          %v682 = vshrl.u32 %v681, 7
          %v683 = vsub.s32 0, %v682
          %v684 = vrot.slane %v656, %v683
          %v686 = vmul.f32 %v684, %v664
          %v687 = vmul.f32 %v686, %v679
          %v689 = vlaneseq
          %v690 = vshrl.u32 %v689, 7
          %v691 = vsub.s32 0, %v690
          %v692 = vrot.slane %v657, %v691
          %v694 = vadd.f32 %v687, %v692
          %v695 = vpack.c.bf16 %v694, %v694
          %v696 = vld [vmem:[%s6] sm:$0xf]
          %v697 = vld [vmem:[%s6 + $0x4] sm:$0xf]
          %v698 = vld [vmem:[%s6 + $0x8] sm:$0xf]
          %v699 = vld [vmem:[%s6 + $0xc] sm:$0xf]
          %v700 = vld [vmem:[#allocation12] sm:$0x1]
          %v702 = vlaneseq
          %v703 = vshrl.u32 %v702, 7
          %v704 = vsub.s32 0, %v703
          %v705 = vrot.slane %v700, %v704
          %v711 = vunpack.c.l.b16 %v696
          %v712 = vunpack.c.l.b16 %v697
          %v713 = vunpack.c.l.b16 %v698
          %v714 = vunpack.c.l.b16 %v699
          %v715 = vpack.c.b16 %v712, %v711
          %v716 = vpack.c.b16 %v714, %v713
          %v720 = vsel %vm658, %v695, 0
          %722 = vmatprep.subr.bf16.mxu0 0
          %723 = vmatpush1.bf16.msra.mxu0 0
          %724 = vmatprep.subr.bf16.mxu0 0
          %725 = vmatpush1.bf16.msra.mxu0 0
          %726 = vmatprep.subr.bf16.mxu0 0
          %727 = vmatpush1.bf16.msra.mxu0 0
          %728 = vmatprep.subr.bf16.mxu0 0
          %729 = vmatpush1.bf16.msra.mxu0 0
          %730 = vmatprep.subr.bf16.mxu0 0
          %731 = vmatpush1.bf16.msra.mxu0 0
          %732 = vmatprep.subr.bf16.mxu0 0
          %733 = vmatpush1.bf16.msra.mxu0 0
          %734 = vmatprep.subr.bf16.mxu0 0
          %735 = vmatpush1.bf16.msra.mxu0 %v716
          %736 = vmatprep.subr.bf16.mxu0 0
          %737 = vmatpush1.bf16.msra.mxu0 %v715
          %738 = vmatprep.subr.bf16.mxu0 0
          %739 = vmatpush2.bf16.msra.mxu0 0
          %740 = vmatprep.subr.bf16.mxu0 0
          %741 = vmatpush2.bf16.msra.mxu0 0
          %742 = vmatprep.subr.bf16.mxu0 0
          %743 = vmatpush2.bf16.msra.mxu0 0
          %744 = vmatprep.subr.bf16.mxu0 0
          %745 = vmatpush2.bf16.msra.mxu0 0
          %746 = vmatprep.subr.bf16.mxu0 0
          %747 = vmatpush2.bf16.msra.mxu0 0
          %748 = vmatprep.subr.bf16.mxu0 0
          %749 = vmatpush2.bf16.msra.mxu0 0
          %750 = vmatprep.subr.bf16.mxu0 0
          %751 = vmatpush2.bf16.msra.mxu0 0
          %752 = vmatprep.subr.bf16.mxu0 0
          %753 = vmatpush2.bf16.msra.mxu0 0
          %754 = vmatprep.mubr.bf16.mxu0 0
          %755 = vmatmul.mubr.bf16.gmra.mxu0 %v720
          %v756 = vpop.f32.mrf.mxu0
          %v757 = vadd.f32 %v705, %v756
          %v758 = vpop.f32.mrf.mxu0
          %v759 = vpop.f32.mrf.mxu0
          %v760 = vpop.f32.mrf.mxu0
          %761 = vdwg.mxu0
          %v762 = vpack.c.bf16 %v757, %v757
          %vm763 = vcmask 60416
          %764 = vst.msk [vmem:[#allocation2] sm:$0xf] %vm763, %v762
          %v766 = vunpack.c.l.b16 %v762
          %v767 = vpack.c.b16 %v766, %v766
          %768 = vrot.lane.b32.xlu0 %v767, 96
          %v769 = vpop.permute.xlu0 %768
          %771 = vst.msk [vmem:[#allocation3] sm:$0xf] %vm763, %v769
          %772 = vrot.lane.b32.xlu0 %v767, 120
          %v773 = vpop.permute.xlu0 %772
          %s775 = scalar_lea.vmem [#allocation2], 4
          %776 = vst.msk [vmem:[%s775] sm:$0xf] %vm763, %v773
          %777 = vrot.lane.b32.xlu0 %v767, 88
          %v778 = vpop.permute.xlu0 %777
          %s780 = scalar_lea.vmem [#allocation3], 4
          %781 = vst.msk [vmem:[%s780] sm:$0xf] %vm763, %v778
          %782 = vrot.lane.b32.xlu0 %v767, 112
          %v783 = vpop.permute.xlu0 %782
          %s785 = scalar_lea.vmem [#allocation2], 8
          %786 = vst.msk [vmem:[%s785] sm:$0xf] %vm763, %v783
          %787 = vrot.lane.b32.xlu0 %v767, 80
          %v788 = vpop.permute.xlu0 %787
          %s790 = scalar_lea.vmem [#allocation3], 8
          %791 = vst.msk [vmem:[%s790] sm:$0xf] %vm763, %v788
          %792 = vrot.lane.b32.xlu0 %v767, 104
          %v793 = vpop.permute.xlu0 %792
          %s795 = scalar_lea.vmem [#allocation2], 12
          %796 = vst.msk [vmem:[%s795] sm:$0xf] %vm763, %v793
          %797 = vrot.lane.b32.xlu0 %v767, 72
          %v798 = vpop.permute.xlu0 %797
          %s800 = scalar_lea.vmem [#allocation3], 12
          %801 = vst.msk [vmem:[%s800] sm:$0xf] %vm763, %v798
        $region116: #{tpu_custom_call.1} parent=83 // pred_fallthru
          _
        %s802 = smul.u32 %s41, 8
        %s803 = scalar_lea.vmem %s647, %s802
        %v804 = vld [vmem:[%s803] sm:$0xff]
        %v805 = vld [vmem:[#allocation7] sm:$0x1]
        %v806 = vld [vmem:[#allocation9] sm:$0x1]
        %vm807 = vcmask 261120
        %v808 = vsel %vm807, %v804, 0.0
        %809 = vadd.xlane.f32.xlu0 %v808
        %v810 = vpop.xlane.xlu0 %809
        %v811 = vrcp.pop 32.0
        %v812 = vmul.f32 %v810, %v811
        %v813 = vsub.f32 %v804, %v812
        %v814 = vmul.f32 %v813, %v813
        %v815 = vsel %vm807, %v814, 0.0
        %816 = vadd.xlane.f32.xlu0 %v815
        %v817 = vpop.xlane.xlu0 %816
        %v818 = vrcp.pop 31.0
        %v819 = vmul.f32 %v817, %v818
        %v820 = vrsqrt.pop %v819
        %v821 = vmul.f32 %v819, %v820
        %vm822 = vcmp.eq.f32.partialorder %v819, inf
        %v823 = vsel %vm822, %v819, %v821
        %vm824 = vcmp.eq.f32.partialorder %v819, 0.0
        %v825 = vand.u32 %v819, 2147483648
        %v826 = vsel %vm824, %v825, %v823
        %v827 = vadd.f32 %v826, 1e-06
        %v828 = vrcp.pop %v827
        %v830 = vlaneseq
        %v831 = vshrl.u32 %v830, 7
        %v832 = vsub.s32 0, %v831
        %v833 = vrot.slane %v805, %v832
        %v835 = vmul.f32 %v833, %v813
        %v836 = vmul.f32 %v835, %v828
        %v838 = vlaneseq
        %v839 = vshrl.u32 %v838, 7
        %v840 = vsub.s32 0, %v839
        %v841 = vrot.slane %v806, %v840
        %v843 = vadd.f32 %v836, %v841
        %v844 = vpack.c.bf16 %v843, %v843
        %v845 = vld [vmem:[%s4] sm:$0xf]
        %v846 = vld [vmem:[%s4 + $0x4] sm:$0xf]
        %v847 = vld [vmem:[%s4 + $0x8] sm:$0xf]
        %v848 = vld [vmem:[%s4 + $0xc] sm:$0xf]
        %v849 = vld [vmem:[#allocation10] sm:$0x1]
        %v851 = vlaneseq
        %v852 = vshrl.u32 %v851, 7
        %v853 = vsub.s32 0, %v852
        %v854 = vrot.slane %v849, %v853
        %v860 = vunpack.c.l.b16 %v845
        %v861 = vunpack.c.l.b16 %v846
        %v862 = vunpack.c.l.b16 %v847
        %v863 = vunpack.c.l.b16 %v848
        %v864 = vpack.c.b16 %v861, %v860
        %v865 = vpack.c.b16 %v863, %v862
        %v869 = vsel %vm807, %v844, 0
        %871 = vmatprep.subr.bf16.mxu0 0
        %872 = vmatpush1.bf16.msra.mxu0 0
        %873 = vmatprep.subr.bf16.mxu0 0
        %874 = vmatpush1.bf16.msra.mxu0 0
        %875 = vmatprep.subr.bf16.mxu0 0
        %876 = vmatpush1.bf16.msra.mxu0 0
        %877 = vmatprep.subr.bf16.mxu0 0
        %878 = vmatpush1.bf16.msra.mxu0 0
        %879 = vmatprep.subr.bf16.mxu0 0
        %880 = vmatpush1.bf16.msra.mxu0 0
        %881 = vmatprep.subr.bf16.mxu0 0
        %882 = vmatpush1.bf16.msra.mxu0 0
        %883 = vmatprep.subr.bf16.mxu0 0
        %884 = vmatpush1.bf16.msra.mxu0 %v865
        %885 = vmatprep.subr.bf16.mxu0 0
        %886 = vmatpush1.bf16.msra.mxu0 %v864
        %887 = vmatprep.subr.bf16.mxu0 0
        %888 = vmatpush2.bf16.msra.mxu0 0
        %889 = vmatprep.subr.bf16.mxu0 0
        %890 = vmatpush2.bf16.msra.mxu0 0
        %891 = vmatprep.subr.bf16.mxu0 0
        %892 = vmatpush2.bf16.msra.mxu0 0
        %893 = vmatprep.subr.bf16.mxu0 0
        %894 = vmatpush2.bf16.msra.mxu0 0
        %895 = vmatprep.subr.bf16.mxu0 0
        %896 = vmatpush2.bf16.msra.mxu0 0
        %897 = vmatprep.subr.bf16.mxu0 0
        %898 = vmatpush2.bf16.msra.mxu0 0
        %899 = vmatprep.subr.bf16.mxu0 0
        %900 = vmatpush2.bf16.msra.mxu0 0
        %901 = vmatprep.subr.bf16.mxu0 0
        %902 = vmatpush2.bf16.msra.mxu0 0
        %903 = vmatprep.mubr.bf16.mxu0 0
        %904 = vmatmul.mubr.bf16.gmra.mxu0 %v869
        %v905 = vpop.f32.mrf.mxu0
        %v906 = vadd.f32 %v854, %v905
        %v907 = vpop.f32.mrf.mxu0
        %v908 = vpop.f32.mrf.mxu0
        %v909 = vpop.f32.mrf.mxu0
        %910 = vdwg.mxu0
        %v911 = vld [vmem:[%s567] sm:$0x3]
        %vm912 = vnez %v911
        %v913 = vpack.c.bf16 %v906, %v906
        %v914 = vld [vmem:[#allocation2] sm:$0xf]
        %vm915 = vcmask 64512
        %v917 = vsel %vm915, %v913, 0
        %v920 = vsel %vm915, %v914, 0
        %922 = vmatprep.subr.bf16.mxu0 0
        %923 = vmatpush1.bf16.xpose.msra.mxu0 0
        %924 = vmatprep.subr.bf16.mxu0 0
        %925 = vmatpush1.bf16.xpose.msra.mxu0 0
        %926 = vmatprep.subr.bf16.mxu0 0
        %927 = vmatpush1.bf16.xpose.msra.mxu0 0
        %928 = vmatprep.subr.bf16.mxu0 0
        %929 = vmatpush1.bf16.xpose.msra.mxu0 0
        %930 = vmatprep.subr.bf16.mxu0 0
        %931 = vmatpush1.bf16.xpose.msra.mxu0 0
        %932 = vmatprep.subr.bf16.mxu0 0
        %933 = vmatpush1.bf16.xpose.msra.mxu0 0
        %934 = vmatprep.subr.bf16.mxu0 0
        %935 = vmatpush1.bf16.xpose.msra.mxu0 0
        %936 = vmatprep.subr.bf16.mxu0 0
        %937 = vmatpush1.bf16.xpose.msra.mxu0 %v920
        %938 = vmatprep.subr.bf16.mxu0 0
        %939 = vmatpush2.bf16.xpose.msra.mxu0 0
        %940 = vmatprep.subr.bf16.mxu0 0
        %941 = vmatpush2.bf16.xpose.msra.mxu0 0
        %942 = vmatprep.subr.bf16.mxu0 0
        %943 = vmatpush2.bf16.xpose.msra.mxu0 0
        %944 = vmatprep.subr.bf16.mxu0 0
        %945 = vmatpush2.bf16.xpose.msra.mxu0 0
        %946 = vmatprep.subr.bf16.mxu0 0
        %947 = vmatpush2.bf16.xpose.msra.mxu0 0
        %948 = vmatprep.subr.bf16.mxu0 0
        %949 = vmatpush2.bf16.xpose.msra.mxu0 0
        %950 = vmatprep.subr.bf16.mxu0 0
        %951 = vmatpush2.bf16.xpose.msra.mxu0 0
        %952 = vmatprep.subr.bf16.mxu0 0
        %953 = vmatpush2.bf16.xpose.msra.mxu0 0
        %954 = vmatprep.mubr.bf16.mxu0 0
        %955 = vmatmul.mubr.bf16.gmra.mxu0 %v917
        %v956 = vpop.f32.mrf.mxu0
        %v957 = vadd.f32 0.0, %v956
        %v958 = vpop.f32.mrf.mxu0
        %v959 = vpop.f32.mrf.mxu0
        %v960 = vpop.f32.mrf.mxu0
        %961 = vdwg.mxu0
        %v962 = vsel %vm912, 16843009, 0
        %v963 = vunpack.c.0.s8 %v962
        %vm964 = vcmp.ne.s32.totalorder %v963, 0
        %v965 = vsel %vm964, -1e+18, %v957
        %v966 = vsel %vm915, %v965, -inf
        %967 = vmax.xlane.f32.xlu0 %v966
        %v968 = vpop.xlane.xlu0 %967
        %v969 = vsub.f32 %v965, %v968
        %v970 = vpack.c.bf16 %v969, %v969
        %v972 = vmul.bf16 %v970, 1069105081
        %v973 = vpow.bf16.pop %v972
        %v974 = vunpack.c.l.bf16 %v973
        %v975 = vsel %vm915, %v974, 0.0
        %976 = vadd.xlane.f32.xlu0 %v975
        %v977 = vpop.xlane.xlu0 %976
        %v978 = vld [vmem:[#allocation3] sm:$0xf]
        %v980 = vsel %vm915, %v973, 0
        %vm982 = vcmask 1043456
        %v984 = vsel %vm982, %v978, 0
        %986 = vmatprep.subr.bf16.mxu0 0
        %987 = vmatpush1.bf16.msra.mxu0 0
        %988 = vmatprep.subr.bf16.mxu0 0
        %989 = vmatpush1.bf16.msra.mxu0 0
        %990 = vmatprep.subr.bf16.mxu0 0
        %991 = vmatpush1.bf16.msra.mxu0 0
        %992 = vmatprep.subr.bf16.mxu0 0
        %993 = vmatpush1.bf16.msra.mxu0 0
        %994 = vmatprep.subr.bf16.mxu0 0
        %995 = vmatpush1.bf16.msra.mxu0 0
        %996 = vmatprep.subr.bf16.mxu0 0
        %997 = vmatpush1.bf16.msra.mxu0 0
        %998 = vmatprep.subr.bf16.mxu0 0
        %999 = vmatpush1.bf16.msra.mxu0 0
        %1000 = vmatprep.subr.bf16.mxu0 0
        %1001 = vmatpush1.bf16.msra.mxu0 %v984
        %1002 = vmatprep.subr.bf16.mxu0 0
        %1003 = vmatpush2.bf16.msra.mxu0 0
        %1004 = vmatprep.subr.bf16.mxu0 0
        %1005 = vmatpush2.bf16.msra.mxu0 0
        %1006 = vmatprep.subr.bf16.mxu0 0
        %1007 = vmatpush2.bf16.msra.mxu0 0
        %1008 = vmatprep.subr.bf16.mxu0 0
        %1009 = vmatpush2.bf16.msra.mxu0 0
        %1010 = vmatprep.subr.bf16.mxu0 0
        %1011 = vmatpush2.bf16.msra.mxu0 0
        %1012 = vmatprep.subr.bf16.mxu0 0
        %1013 = vmatpush2.bf16.msra.mxu0 0
        %1014 = vmatprep.subr.bf16.mxu0 0
        %1015 = vmatpush2.bf16.msra.mxu0 0
        %1016 = vmatprep.subr.bf16.mxu0 0
        %1017 = vmatpush2.bf16.msra.mxu0 0
        %1018 = vmatprep.mubr.bf16.mxu0 0
        %1019 = vmatmul.mubr.bf16.gmra.mxu0 %v980
        %v1020 = vpop.f32.mrf.mxu0
        %v1021 = vadd.f32 0.0, %v1020
        %v1022 = vpop.f32.mrf.mxu0
        %v1023 = vpop.f32.mrf.mxu0
        %v1024 = vpop.f32.mrf.mxu0
        %1025 = vdwg.mxu0
        %v1026 = vrcp.pop %v977
        %v1027 = vmul.f32 %v1021, %v1026
        %v1028 = vpack.c.bf16 %v1027, %v1027
        %s1029 = scalar_lea.vmem [#allocation2], 4
        %v1030 = vld [vmem:[%s1029] sm:$0xf]
        %1032 = vrot.lane.b32.xlu0 %v913, 120
        %v1033 = vpop.permute.xlu0 %1032
        %v1035 = vsel %vm915, %v1033, 0
        %v1038 = vsel %vm915, %v1030, 0
        %1040 = vmatprep.subr.bf16.mxu0 0
        %1041 = vmatpush1.bf16.xpose.msra.mxu0 0
        %1042 = vmatprep.subr.bf16.mxu0 0
        %1043 = vmatpush1.bf16.xpose.msra.mxu0 0
        %1044 = vmatprep.subr.bf16.mxu0 0
        %1045 = vmatpush1.bf16.xpose.msra.mxu0 0
        %1046 = vmatprep.subr.bf16.mxu0 0
        %1047 = vmatpush1.bf16.xpose.msra.mxu0 0
        %1048 = vmatprep.subr.bf16.mxu0 0
        %1049 = vmatpush1.bf16.xpose.msra.mxu0 0
        %1050 = vmatprep.subr.bf16.mxu0 0
        %1051 = vmatpush1.bf16.xpose.msra.mxu0 0
        %1052 = vmatprep.subr.bf16.mxu0 0
        %1053 = vmatpush1.bf16.xpose.msra.mxu0 0
        %1054 = vmatprep.subr.bf16.mxu0 0
        %1055 = vmatpush1.bf16.xpose.msra.mxu0 %v1038
        %1056 = vmatprep.subr.bf16.mxu0 0
        %1057 = vmatpush2.bf16.xpose.msra.mxu0 0
        %1058 = vmatprep.subr.bf16.mxu0 0
        %1059 = vmatpush2.bf16.xpose.msra.mxu0 0
        %1060 = vmatprep.subr.bf16.mxu0 0
        %1061 = vmatpush2.bf16.xpose.msra.mxu0 0
        %1062 = vmatprep.subr.bf16.mxu0 0
        %1063 = vmatpush2.bf16.xpose.msra.mxu0 0
        %1064 = vmatprep.subr.bf16.mxu0 0
        %1065 = vmatpush2.bf16.xpose.msra.mxu0 0
        %1066 = vmatprep.subr.bf16.mxu0 0
        %1067 = vmatpush2.bf16.xpose.msra.mxu0 0
        %1068 = vmatprep.subr.bf16.mxu0 0
        %1069 = vmatpush2.bf16.xpose.msra.mxu0 0
        %1070 = vmatprep.subr.bf16.mxu0 0
        %1071 = vmatpush2.bf16.xpose.msra.mxu0 0
        %1072 = vmatprep.mubr.bf16.mxu0 0
        %1073 = vmatmul.mubr.bf16.gmra.mxu0 %v1035
        %v1074 = vpop.f32.mrf.mxu0
        %v1075 = vadd.f32 0.0, %v1074
        %v1076 = vpop.f32.mrf.mxu0
        %v1077 = vpop.f32.mrf.mxu0
        %v1078 = vpop.f32.mrf.mxu0
        %1079 = vdwg.mxu0
        %v1080 = vsel %vm964, -1e+18, %v1075
        %v1081 = vsel %vm915, %v1080, -inf
        %1082 = vmax.xlane.f32.xlu0 %v1081
        %v1083 = vpop.xlane.xlu0 %1082
        %v1084 = vsub.f32 %v1080, %v1083
        %v1085 = vpack.c.bf16 %v1084, %v1084
        %v1087 = vmul.bf16 %v1085, 1069105081
        %v1088 = vpow.bf16.pop %v1087
        %v1089 = vunpack.c.l.bf16 %v1088
        %v1090 = vsel %vm915, %v1089, 0.0
        %1091 = vadd.xlane.f32.xlu0 %v1090
        %v1092 = vpop.xlane.xlu0 %1091
        %s1093 = scalar_lea.vmem [#allocation3], 4
        %v1094 = vld [vmem:[%s1093] sm:$0xf]
        %v1096 = vsel %vm915, %v1088, 0
        %v1099 = vsel %vm982, %v1094, 0
        %1101 = vmatprep.subr.bf16.mxu0 0
        %1102 = vmatpush1.bf16.msra.mxu0 0
        %1103 = vmatprep.subr.bf16.mxu0 0
        %1104 = vmatpush1.bf16.msra.mxu0 0
        %1105 = vmatprep.subr.bf16.mxu0 0
        %1106 = vmatpush1.bf16.msra.mxu0 0
        %1107 = vmatprep.subr.bf16.mxu0 0
        %1108 = vmatpush1.bf16.msra.mxu0 0
        %1109 = vmatprep.subr.bf16.mxu0 0
        %1110 = vmatpush1.bf16.msra.mxu0 0
        %1111 = vmatprep.subr.bf16.mxu0 0
        %1112 = vmatpush1.bf16.msra.mxu0 0
        %1113 = vmatprep.subr.bf16.mxu0 0
        %1114 = vmatpush1.bf16.msra.mxu0 0
        %1115 = vmatprep.subr.bf16.mxu0 0
        %1116 = vmatpush1.bf16.msra.mxu0 %v1099
        %1117 = vmatprep.subr.bf16.mxu0 0
        %1118 = vmatpush2.bf16.msra.mxu0 0
        %1119 = vmatprep.subr.bf16.mxu0 0
        %1120 = vmatpush2.bf16.msra.mxu0 0
        %1121 = vmatprep.subr.bf16.mxu0 0
        %1122 = vmatpush2.bf16.msra.mxu0 0
        %1123 = vmatprep.subr.bf16.mxu0 0
        %1124 = vmatpush2.bf16.msra.mxu0 0
        %1125 = vmatprep.subr.bf16.mxu0 0
        %1126 = vmatpush2.bf16.msra.mxu0 0
        %1127 = vmatprep.subr.bf16.mxu0 0
        %1128 = vmatpush2.bf16.msra.mxu0 0
        %1129 = vmatprep.subr.bf16.mxu0 0
        %1130 = vmatpush2.bf16.msra.mxu0 0
        %1131 = vmatprep.subr.bf16.mxu0 0
        %1132 = vmatpush2.bf16.msra.mxu0 0
        %1133 = vmatprep.mubr.bf16.mxu0 0
        %1134 = vmatmul.mubr.bf16.gmra.mxu0 %v1096
        %v1135 = vpop.f32.mrf.mxu0
        %v1136 = vadd.f32 0.0, %v1135
        %v1137 = vpop.f32.mrf.mxu0
        %v1138 = vpop.f32.mrf.mxu0
        %v1139 = vpop.f32.mrf.mxu0
        %1140 = vdwg.mxu0
        %v1141 = vrcp.pop %v1092
        %v1142 = vmul.f32 %v1136, %v1141
        %v1143 = vpack.c.bf16 %v1142, %v1142
        %s1144 = scalar_lea.vmem [#allocation2], 8
        %v1145 = vld [vmem:[%s1144] sm:$0xf]
        %1146 = vrot.lane.b32.xlu0 %v913, 112
        %v1147 = vpop.permute.xlu0 %1146
        %v1149 = vsel %vm915, %v1147, 0
        %v1152 = vsel %vm915, %v1145, 0
        %1154 = vmatprep.subr.bf16.mxu0 0
        %1155 = vmatpush1.bf16.xpose.msra.mxu0 0
        %1156 = vmatprep.subr.bf16.mxu0 0
        %1157 = vmatpush1.bf16.xpose.msra.mxu0 0
        %1158 = vmatprep.subr.bf16.mxu0 0
        %1159 = vmatpush1.bf16.xpose.msra.mxu0 0
        %1160 = vmatprep.subr.bf16.mxu0 0
        %1161 = vmatpush1.bf16.xpose.msra.mxu0 0
        %1162 = vmatprep.subr.bf16.mxu0 0
        %1163 = vmatpush1.bf16.xpose.msra.mxu0 0
        %1164 = vmatprep.subr.bf16.mxu0 0
        %1165 = vmatpush1.bf16.xpose.msra.mxu0 0
        %1166 = vmatprep.subr.bf16.mxu0 0
        %1167 = vmatpush1.bf16.xpose.msra.mxu0 0
        %1168 = vmatprep.subr.bf16.mxu0 0
        %1169 = vmatpush1.bf16.xpose.msra.mxu0 %v1152
        %1170 = vmatprep.subr.bf16.mxu0 0
        %1171 = vmatpush2.bf16.xpose.msra.mxu0 0
        %1172 = vmatprep.subr.bf16.mxu0 0
        %1173 = vmatpush2.bf16.xpose.msra.mxu0 0
        %1174 = vmatprep.subr.bf16.mxu0 0
        %1175 = vmatpush2.bf16.xpose.msra.mxu0 0
        %1176 = vmatprep.subr.bf16.mxu0 0
        %1177 = vmatpush2.bf16.xpose.msra.mxu0 0
        %1178 = vmatprep.subr.bf16.mxu0 0
        %1179 = vmatpush2.bf16.xpose.msra.mxu0 0
        %1180 = vmatprep.subr.bf16.mxu0 0
        %1181 = vmatpush2.bf16.xpose.msra.mxu0 0
        %1182 = vmatprep.subr.bf16.mxu0 0
        %1183 = vmatpush2.bf16.xpose.msra.mxu0 0
        %1184 = vmatprep.subr.bf16.mxu0 0
        %1185 = vmatpush2.bf16.xpose.msra.mxu0 0
        %1186 = vmatprep.mubr.bf16.mxu0 0
        %1187 = vmatmul.mubr.bf16.gmra.mxu0 %v1149
        %v1188 = vpop.f32.mrf.mxu0
        %v1189 = vadd.f32 0.0, %v1188
        %v1190 = vpop.f32.mrf.mxu0
        %v1191 = vpop.f32.mrf.mxu0
        %v1192 = vpop.f32.mrf.mxu0
        %1193 = vdwg.mxu0
        %v1194 = vsel %vm964, -1e+18, %v1189
        %v1195 = vsel %vm915, %v1194, -inf
        %1196 = vmax.xlane.f32.xlu0 %v1195
        %v1197 = vpop.xlane.xlu0 %1196
        %v1198 = vsub.f32 %v1194, %v1197
        %v1199 = vpack.c.bf16 %v1198, %v1198
        %v1201 = vmul.bf16 %v1199, 1069105081
        %v1202 = vpow.bf16.pop %v1201
        %v1203 = vunpack.c.l.bf16 %v1202
        %v1204 = vsel %vm915, %v1203, 0.0
        %1205 = vadd.xlane.f32.xlu0 %v1204
        %v1206 = vpop.xlane.xlu0 %1205
        %s1207 = scalar_lea.vmem [#allocation3], 8
        %v1208 = vld [vmem:[%s1207] sm:$0xf]
        %v1210 = vsel %vm915, %v1202, 0
        %v1213 = vsel %vm982, %v1208, 0
        %1215 = vmatprep.subr.bf16.mxu0 0
        %1216 = vmatpush1.bf16.msra.mxu0 0
        %1217 = vmatprep.subr.bf16.mxu0 0
        %1218 = vmatpush1.bf16.msra.mxu0 0
        %1219 = vmatprep.subr.bf16.mxu0 0
        %1220 = vmatpush1.bf16.msra.mxu0 0
        %1221 = vmatprep.subr.bf16.mxu0 0
        %1222 = vmatpush1.bf16.msra.mxu0 0
        %1223 = vmatprep.subr.bf16.mxu0 0
        %1224 = vmatpush1.bf16.msra.mxu0 0
        %1225 = vmatprep.subr.bf16.mxu0 0
        %1226 = vmatpush1.bf16.msra.mxu0 0
        %1227 = vmatprep.subr.bf16.mxu0 0
        %1228 = vmatpush1.bf16.msra.mxu0 0
        %1229 = vmatprep.subr.bf16.mxu0 0
        %1230 = vmatpush1.bf16.msra.mxu0 %v1213
        %1231 = vmatprep.subr.bf16.mxu0 0
        %1232 = vmatpush2.bf16.msra.mxu0 0
        %1233 = vmatprep.subr.bf16.mxu0 0
        %1234 = vmatpush2.bf16.msra.mxu0 0
        %1235 = vmatprep.subr.bf16.mxu0 0
        %1236 = vmatpush2.bf16.msra.mxu0 0
        %1237 = vmatprep.subr.bf16.mxu0 0
        %1238 = vmatpush2.bf16.msra.mxu0 0
        %1239 = vmatprep.subr.bf16.mxu0 0
        %1240 = vmatpush2.bf16.msra.mxu0 0
        %1241 = vmatprep.subr.bf16.mxu0 0
        %1242 = vmatpush2.bf16.msra.mxu0 0
        %1243 = vmatprep.subr.bf16.mxu0 0
        %1244 = vmatpush2.bf16.msra.mxu0 0
        %1245 = vmatprep.subr.bf16.mxu0 0
        %1246 = vmatpush2.bf16.msra.mxu0 0
        %1247 = vmatprep.mubr.bf16.mxu0 0
        %1248 = vmatmul.mubr.bf16.gmra.mxu0 %v1210
        %v1249 = vpop.f32.mrf.mxu0
        %v1250 = vadd.f32 0.0, %v1249
        %v1251 = vpop.f32.mrf.mxu0
        %v1252 = vpop.f32.mrf.mxu0
        %v1253 = vpop.f32.mrf.mxu0
        %1254 = vdwg.mxu0
        %v1255 = vrcp.pop %v1206
        %v1256 = vmul.f32 %v1250, %v1255
        %v1257 = vpack.c.bf16 %v1256, %v1256
        %s1258 = scalar_lea.vmem [#allocation2], 12
        %v1259 = vld [vmem:[%s1258] sm:$0xf]
        %1260 = vrot.lane.b32.xlu0 %v913, 104
        %v1261 = vpop.permute.xlu0 %1260
        %v1263 = vsel %vm915, %v1261, 0
        %v1266 = vsel %vm915, %v1259, 0
        %1268 = vmatprep.subr.bf16.mxu0 0
        %1269 = vmatpush1.bf16.xpose.msra.mxu0 0
        %1270 = vmatprep.subr.bf16.mxu0 0
        %1271 = vmatpush1.bf16.xpose.msra.mxu0 0
        %1272 = vmatprep.subr.bf16.mxu0 0
        %1273 = vmatpush1.bf16.xpose.msra.mxu0 0
        %1274 = vmatprep.subr.bf16.mxu0 0
        %1275 = vmatpush1.bf16.xpose.msra.mxu0 0
        %1276 = vmatprep.subr.bf16.mxu0 0
        %1277 = vmatpush1.bf16.xpose.msra.mxu0 0
        %1278 = vmatprep.subr.bf16.mxu0 0
        %1279 = vmatpush1.bf16.xpose.msra.mxu0 0
        %1280 = vmatprep.subr.bf16.mxu0 0
        %1281 = vmatpush1.bf16.xpose.msra.mxu0 0
        %1282 = vmatprep.subr.bf16.mxu0 0
        %1283 = vmatpush1.bf16.xpose.msra.mxu0 %v1266
        %1284 = vmatprep.subr.bf16.mxu0 0
        %1285 = vmatpush2.bf16.xpose.msra.mxu0 0
        %1286 = vmatprep.subr.bf16.mxu0 0
        %1287 = vmatpush2.bf16.xpose.msra.mxu0 0
        %1288 = vmatprep.subr.bf16.mxu0 0
        %1289 = vmatpush2.bf16.xpose.msra.mxu0 0
        %1290 = vmatprep.subr.bf16.mxu0 0
        %1291 = vmatpush2.bf16.xpose.msra.mxu0 0
        %1292 = vmatprep.subr.bf16.mxu0 0
        %1293 = vmatpush2.bf16.xpose.msra.mxu0 0
        %1294 = vmatprep.subr.bf16.mxu0 0
        %1295 = vmatpush2.bf16.xpose.msra.mxu0 0
        %1296 = vmatprep.subr.bf16.mxu0 0
        %1297 = vmatpush2.bf16.xpose.msra.mxu0 0
        %1298 = vmatprep.subr.bf16.mxu0 0
        %1299 = vmatpush2.bf16.xpose.msra.mxu0 0
        %1300 = vmatprep.mubr.bf16.mxu0 0
        %1301 = vmatmul.mubr.bf16.gmra.mxu0 %v1263
        %v1302 = vpop.f32.mrf.mxu0
        %v1303 = vadd.f32 0.0, %v1302
        %v1304 = vpop.f32.mrf.mxu0
        %v1305 = vpop.f32.mrf.mxu0
        %v1306 = vpop.f32.mrf.mxu0
        %1307 = vdwg.mxu0
        %v1308 = vsel %vm964, -1e+18, %v1303
        %v1309 = vsel %vm915, %v1308, -inf
        %1310 = vmax.xlane.f32.xlu0 %v1309
        %v1311 = vpop.xlane.xlu0 %1310
        %v1312 = vsub.f32 %v1308, %v1311
        %v1313 = vpack.c.bf16 %v1312, %v1312
        %v1315 = vmul.bf16 %v1313, 1069105081
        %v1316 = vpow.bf16.pop %v1315
        %v1317 = vunpack.c.l.bf16 %v1316
        %v1318 = vsel %vm915, %v1317, 0.0
        %1319 = vadd.xlane.f32.xlu0 %v1318
        %v1320 = vpop.xlane.xlu0 %1319
        %s1321 = scalar_lea.vmem [#allocation3], 12
        %v1322 = vld [vmem:[%s1321] sm:$0xf]
        %v1324 = vsel %vm915, %v1316, 0
        %v1327 = vsel %vm982, %v1322, 0
        %1329 = vmatprep.subr.bf16.mxu0 0
        %1330 = vmatpush1.bf16.msra.mxu0 0
        %1331 = vmatprep.subr.bf16.mxu0 0
        %1332 = vmatpush1.bf16.msra.mxu0 0
        %1333 = vmatprep.subr.bf16.mxu0 0
        %1334 = vmatpush1.bf16.msra.mxu0 0
        %1335 = vmatprep.subr.bf16.mxu0 0
        %1336 = vmatpush1.bf16.msra.mxu0 0
        %1337 = vmatprep.subr.bf16.mxu0 0
        %1338 = vmatpush1.bf16.msra.mxu0 0
        %1339 = vmatprep.subr.bf16.mxu0 0
        %1340 = vmatpush1.bf16.msra.mxu0 0
        %1341 = vmatprep.subr.bf16.mxu0 0
        %1342 = vmatpush1.bf16.msra.mxu0 0
        %1343 = vmatprep.subr.bf16.mxu0 0
        %1344 = vmatpush1.bf16.msra.mxu0 %v1327
        %1345 = vmatprep.subr.bf16.mxu0 0
        %1346 = vmatpush2.bf16.msra.mxu0 0
        %1347 = vmatprep.subr.bf16.mxu0 0
        %1348 = vmatpush2.bf16.msra.mxu0 0
        %1349 = vmatprep.subr.bf16.mxu0 0
        %1350 = vmatpush2.bf16.msra.mxu0 0
        %1351 = vmatprep.subr.bf16.mxu0 0
        %1352 = vmatpush2.bf16.msra.mxu0 0
        %1353 = vmatprep.subr.bf16.mxu0 0
        %1354 = vmatpush2.bf16.msra.mxu0 0
        %1355 = vmatprep.subr.bf16.mxu0 0
        %1356 = vmatpush2.bf16.msra.mxu0 0
        %1357 = vmatprep.subr.bf16.mxu0 0
        %1358 = vmatpush2.bf16.msra.mxu0 0
        %1359 = vmatprep.subr.bf16.mxu0 0
        %1360 = vmatpush2.bf16.msra.mxu0 0
        %1361 = vmatprep.mubr.bf16.mxu0 0
        %1362 = vmatmul.mubr.bf16.gmra.mxu0 %v1324
        %v1363 = vpop.f32.mrf.mxu0
        %v1364 = vadd.f32 0.0, %v1363
        %v1365 = vpop.f32.mrf.mxu0
        %v1366 = vpop.f32.mrf.mxu0
        %v1367 = vpop.f32.mrf.mxu0
        %1368 = vdwg.mxu0
        %v1369 = vrcp.pop %v1320
        %v1370 = vmul.f32 %v1364, %v1369
        %v1371 = vpack.c.bf16 %v1370, %v1370
        %1373 = vrot.lane.b32.xlu0 %v1143, 8
        %v1374 = vpop.permute.xlu0 %1373
        %1376 = vrot.lane.b32.xlu0 %v1257, 16
        %v1377 = vpop.permute.xlu0 %1376
        %1379 = vrot.lane.b32.xlu0 %v1371, 24
        %v1380 = vpop.permute.xlu0 %1379
        %v1383 = vsel %vm915, %v1028, %v1374
        %vm1384 = vcmask 130048
        %v1386 = vsel %vm1384, %v1383, %v1377
        %vm1387 = vcmask 195584
        %v1389 = vsel %vm1387, %v1386, %v1380
        %v1390 = vld [vmem:[#allocation13] sm:$0xf]
        %v1391 = vld [vmem:[#allocation13 + $0x4] sm:$0xf]
        %v1392 = vld [vmem:[#allocation13 + $0x8] sm:$0xf]
        %v1393 = vld [vmem:[#allocation13 + $0xc] sm:$0xf]
        %v1394 = vld [vmem:[#allocation15] sm:$0x1]
        %v1396 = vlaneseq
        %v1397 = vshrl.u32 %v1396, 7
        %v1398 = vsub.s32 0, %v1397
        %v1399 = vrot.slane %v1394, %v1398
        %v1405 = vunpack.c.l.b16 %v1390
        %v1406 = vunpack.c.l.b16 %v1391
        %v1407 = vunpack.c.l.b16 %v1392
        %v1408 = vunpack.c.l.b16 %v1393
        %v1409 = vpack.c.b16 %v1406, %v1405
        %v1410 = vpack.c.b16 %v1408, %v1407
        %v1413 = vsel %vm807, %v1389, 0
        %1415 = vmatprep.subr.bf16.mxu0 0
        %1416 = vmatpush1.bf16.msra.mxu0 0
        %1417 = vmatprep.subr.bf16.mxu0 0
        %1418 = vmatpush1.bf16.msra.mxu0 0
        %1419 = vmatprep.subr.bf16.mxu0 0
        %1420 = vmatpush1.bf16.msra.mxu0 0
        %1421 = vmatprep.subr.bf16.mxu0 0
        %1422 = vmatpush1.bf16.msra.mxu0 0
        %1423 = vmatprep.subr.bf16.mxu0 0
        %1424 = vmatpush1.bf16.msra.mxu0 0
        %1425 = vmatprep.subr.bf16.mxu0 0
        %1426 = vmatpush1.bf16.msra.mxu0 0
        %1427 = vmatprep.subr.bf16.mxu0 0
        %1428 = vmatpush1.bf16.msra.mxu0 %v1410
        %1429 = vmatprep.subr.bf16.mxu0 0
        %1430 = vmatpush1.bf16.msra.mxu0 %v1409
        %1431 = vmatprep.subr.bf16.mxu0 0
        %1432 = vmatpush2.bf16.msra.mxu0 0
        %1433 = vmatprep.subr.bf16.mxu0 0
        %1434 = vmatpush2.bf16.msra.mxu0 0
        %1435 = vmatprep.subr.bf16.mxu0 0
        %1436 = vmatpush2.bf16.msra.mxu0 0
        %1437 = vmatprep.subr.bf16.mxu0 0
        %1438 = vmatpush2.bf16.msra.mxu0 0
        %1439 = vmatprep.subr.bf16.mxu0 0
        %1440 = vmatpush2.bf16.msra.mxu0 0
        %1441 = vmatprep.subr.bf16.mxu0 0
        %1442 = vmatpush2.bf16.msra.mxu0 0
        %1443 = vmatprep.subr.bf16.mxu0 0
        %1444 = vmatpush2.bf16.msra.mxu0 0
        %1445 = vmatprep.subr.bf16.mxu0 0
        %1446 = vmatpush2.bf16.msra.mxu0 0
        %1447 = vmatprep.mubr.bf16.mxu0 0
        %1448 = vmatmul.mubr.bf16.gmra.mxu0 %v1413
        %v1449 = vpop.f32.mrf.mxu0
        %v1450 = vadd.f32 %v1399, %v1449
        %v1451 = vpop.f32.mrf.mxu0
        %v1452 = vpop.f32.mrf.mxu0
        %v1453 = vpop.f32.mrf.mxu0
        %1454 = vdwg.mxu0
        %v1455 = vadd.f32 %v1450, %v804
        %v1456 = vld [vmem:[%s10] sm:$0x1]
        %v1457 = vld [vmem:[%s11] sm:$0x1]
        %v1458 = vsel %vm807, %v1455, 0.0
        %1459 = vadd.xlane.f32.xlu0 %v1458
        %v1460 = vpop.xlane.xlu0 %1459
        %v1461 = vmul.f32 %v1460, %v811
        %v1462 = vsub.f32 %v1455, %v1461
        %v1463 = vmul.f32 %v1462, %v1462
        %v1464 = vsel %vm807, %v1463, 0.0
        %1465 = vadd.xlane.f32.xlu0 %v1464
        %v1466 = vpop.xlane.xlu0 %1465
        %v1467 = vmul.f32 %v1466, %v818
        %v1468 = vrsqrt.pop %v1467
        %v1469 = vmul.f32 %v1467, %v1468
        %vm1470 = vcmp.eq.f32.partialorder %v1467, inf
        %v1471 = vsel %vm1470, %v1467, %v1469
        %vm1472 = vcmp.eq.f32.partialorder %v1467, 0.0
        %v1473 = vand.u32 %v1467, 2147483648
        %v1474 = vsel %vm1472, %v1473, %v1471
        %v1475 = vadd.f32 %v1474, 1e-06
        %v1476 = vrcp.pop %v1475
        %v1478 = vlaneseq
        %v1479 = vshrl.u32 %v1478, 7
        %v1480 = vsub.s32 0, %v1479
        %v1481 = vrot.slane %v1456, %v1480
        %v1483 = vmul.f32 %v1481, %v1462
        %v1484 = vmul.f32 %v1483, %v1476
        %v1486 = vlaneseq
        %v1487 = vshrl.u32 %v1486, 7
        %v1488 = vsub.s32 0, %v1487
        %v1489 = vrot.slane %v1457, %v1488
        %v1491 = vadd.f32 %v1484, %v1489
        %v1492 = vpack.c.bf16 %v1491, %v1491
        %v1493 = vld [vmem:[%s12] sm:$0xf]
        %v1494 = vld [vmem:[%s12 + $0x4] sm:$0xf]
        %v1495 = vld [vmem:[%s12 + $0x8] sm:$0xf]
        %v1496 = vld [vmem:[%s12 + $0xc] sm:$0xf]
        %v1497 = vld [vmem:[%s13] sm:$0x1]
        %v1499 = vlaneseq
        %v1500 = vshrl.u32 %v1499, 7
        %v1501 = vsub.s32 0, %v1500
        %v1502 = vrot.slane %v1497, %v1501
        %v1508 = vunpack.c.l.b16 %v1493
        %v1509 = vunpack.c.l.b16 %v1494
        %v1510 = vunpack.c.l.b16 %v1495
        %v1511 = vunpack.c.l.b16 %v1496
        %v1512 = vpack.c.b16 %v1509, %v1508
        %v1513 = vpack.c.b16 %v1511, %v1510
        %v1517 = vsel %vm807, %v1492, 0
        %1519 = vmatprep.subr.bf16.mxu0 0
        %1520 = vmatpush1.bf16.msra.mxu0 0
        %1521 = vmatprep.subr.bf16.mxu0 0
        %1522 = vmatpush1.bf16.msra.mxu0 0
        %1523 = vmatprep.subr.bf16.mxu0 0
        %1524 = vmatpush1.bf16.msra.mxu0 0
        %1525 = vmatprep.subr.bf16.mxu0 0
        %1526 = vmatpush1.bf16.msra.mxu0 0
        %1527 = vmatprep.subr.bf16.mxu0 0
        %1528 = vmatpush1.bf16.msra.mxu0 0
        %1529 = vmatprep.subr.bf16.mxu0 0
        %1530 = vmatpush1.bf16.msra.mxu0 0
        %1531 = vmatprep.subr.bf16.mxu0 0
        %1532 = vmatpush1.bf16.msra.mxu0 %v1513
        %1533 = vmatprep.subr.bf16.mxu0 0
        %1534 = vmatpush1.bf16.msra.mxu0 %v1512
        %1535 = vmatprep.subr.bf16.mxu0 0
        %1536 = vmatpush2.bf16.msra.mxu0 0
        %1537 = vmatprep.subr.bf16.mxu0 0
        %1538 = vmatpush2.bf16.msra.mxu0 0
        %1539 = vmatprep.subr.bf16.mxu0 0
        %1540 = vmatpush2.bf16.msra.mxu0 0
        %1541 = vmatprep.subr.bf16.mxu0 0
        %1542 = vmatpush2.bf16.msra.mxu0 0
        %1543 = vmatprep.subr.bf16.mxu0 0
        %1544 = vmatpush2.bf16.msra.mxu0 0
        %1545 = vmatprep.subr.bf16.mxu0 0
        %1546 = vmatpush2.bf16.msra.mxu0 0
        %1547 = vmatprep.subr.bf16.mxu0 0
        %1548 = vmatpush2.bf16.msra.mxu0 0
        %1549 = vmatprep.subr.bf16.mxu0 0
        %1550 = vmatpush2.bf16.msra.mxu0 0
        %1551 = vmatprep.mubr.bf16.mxu0 0
        %1552 = vmatmul.mubr.bf16.gmra.mxu0 %v1517
        %v1553 = vpop.f32.mrf.mxu0
        %v1554 = vadd.f32 %v1502, %v1553
        %v1555 = vpop.f32.mrf.mxu0
        %v1556 = vpop.f32.mrf.mxu0
        %v1557 = vpop.f32.mrf.mxu0
        %1558 = vdwg.mxu0
        %v1559 = vmax.f32 %v1554, 0.0
        %v1560 = vpack.c.bf16 %v1559, %v1559
        %v1561 = vld [vmem:[%s14] sm:$0xf]
        %v1562 = vld [vmem:[%s14 + $0x4] sm:$0xf]
        %v1563 = vld [vmem:[%s14 + $0x8] sm:$0xf]
        %v1564 = vld [vmem:[%s14 + $0xc] sm:$0xf]
        %v1565 = vld [vmem:[%s14 + $0x10] sm:$0xf]
        %v1566 = vld [vmem:[%s14 + $0x14] sm:$0xf]
        %v1567 = vld [vmem:[%s14 + $0x18] sm:$0xf]
        %v1568 = vld [vmem:[%s14 + $0x1c] sm:$0xf]
        %v1569 = vld [vmem:[%s15] sm:$0x1]
        %v1571 = vlaneseq
        %v1572 = vshrl.u32 %v1571, 7
        %v1573 = vsub.s32 0, %v1572
        %v1574 = vrot.slane %v1569, %v1573
        %v1584 = vunpack.c.l.b16 %v1561
        %v1585 = vunpack.c.l.b16 %v1562
        %v1586 = vunpack.c.l.b16 %v1563
        %v1587 = vunpack.c.l.b16 %v1564
        %v1588 = vunpack.c.l.b16 %v1565
        %v1589 = vunpack.c.l.b16 %v1566
        %v1590 = vunpack.c.l.b16 %v1567
        %v1591 = vunpack.c.l.b16 %v1568
        %v1592 = vpack.c.b16 %v1585, %v1584
        %v1593 = vpack.c.b16 %v1587, %v1586
        %v1594 = vpack.c.b16 %v1589, %v1588
        %v1595 = vpack.c.b16 %v1591, %v1590
        %vm1600 = vcmask 523264
        %v1602 = vsel %vm1600, %v1560, 0
        %1604 = vmatprep.subr.bf16.mxu0 0
        %1605 = vmatpush1.bf16.msra.mxu0 0
        %1606 = vmatprep.subr.bf16.mxu0 0
        %1607 = vmatpush1.bf16.msra.mxu0 0
        %1608 = vmatprep.subr.bf16.mxu0 0
        %1609 = vmatpush1.bf16.msra.mxu0 0
        %1610 = vmatprep.subr.bf16.mxu0 0
        %1611 = vmatpush1.bf16.msra.mxu0 0
        %1612 = vmatprep.subr.bf16.mxu0 0
        %1613 = vmatpush1.bf16.msra.mxu0 %v1595
        %1614 = vmatprep.subr.bf16.mxu0 0
        %1615 = vmatpush1.bf16.msra.mxu0 %v1594
        %1616 = vmatprep.subr.bf16.mxu0 0
        %1617 = vmatpush1.bf16.msra.mxu0 %v1593
        %1618 = vmatprep.subr.bf16.mxu0 0
        %1619 = vmatpush1.bf16.msra.mxu0 %v1592
        %1620 = vmatprep.subr.bf16.mxu0 0
        %1621 = vmatpush2.bf16.msra.mxu0 0
        %1622 = vmatprep.subr.bf16.mxu0 0
        %1623 = vmatpush2.bf16.msra.mxu0 0
        %1624 = vmatprep.subr.bf16.mxu0 0
        %1625 = vmatpush2.bf16.msra.mxu0 0
        %1626 = vmatprep.subr.bf16.mxu0 0
        %1627 = vmatpush2.bf16.msra.mxu0 0
        %1628 = vmatprep.subr.bf16.mxu0 0
        %1629 = vmatpush2.bf16.msra.mxu0 0
        %1630 = vmatprep.subr.bf16.mxu0 0
        %1631 = vmatpush2.bf16.msra.mxu0 0
        %1632 = vmatprep.subr.bf16.mxu0 0
        %1633 = vmatpush2.bf16.msra.mxu0 0
        %1634 = vmatprep.subr.bf16.mxu0 0
        %1635 = vmatpush2.bf16.msra.mxu0 0
        %1636 = vmatprep.mubr.bf16.mxu0 0
        %1637 = vmatmul.mubr.bf16.gmra.mxu0 %v1602
        %v1638 = vpop.f32.mrf.mxu0
        %v1639 = vadd.f32 %v1574, %v1638
        %v1640 = vpop.f32.mrf.mxu0
        %v1641 = vpop.f32.mrf.mxu0
        %v1642 = vpop.f32.mrf.mxu0
        %1643 = vdwg.mxu0
        %v1644 = vadd.f32 %v1639, %v1455
        %1645 = vst.msk [vmem:[%s643] sm:$0xff] %vm807, %v1644
        %s1646 = sand.u32 %s406, 1
        %s1647 = scalar_lea.sflag [#allocation6], %s1646
        %s1648 = sand.u32 %s406, 1
        %s1649 = smul.addr %s1648, 8
        %s1650 = scalar_lea.vmem [#allocation16], %s1649
        // Predicated region
        $region117: #{tpu_custom_call.1} parent=83 // pred_check
          %p1651 = pneg %p416
        $region118: #{tpu_custom_call.1} parent=83 // pred_check_branch
          %1653 = sbr.rel (%p1651) target = $region120
        $region119: #{tpu_custom_call.1} parent=83 // pred_region
          %s1655 = ssub.s32 128, 128
          %1656 = vsyncadd %s1647, %s1655
          %s1657 = sadd.s32 %s41, %s40
          %s1658 = smul.addr %s1657, 128
          %s1659 = scalar_lea.hbm %s16, %s1658
          %s1661 = sshll.u32 %s1650, 4
          %s1662 = int_to_ptr.vmem [resolvable:$true] %s1661
          %1664 = dma.vmem_to_hbm [thread:$0]  %s1662, 128, %s1659, %s1647
        $region120: #{tpu_custom_call.1} parent=83 // pred_fallthru
          _
      $region84: #{tpu_custom_call.1} parent=5 // pred_fallthru
        _
      %p1665 = scmp.le.s32.totalorder 2, %s31
      // Predicated region
      $region121: #{tpu_custom_call.1} parent=5 // pred_check
        %p1666 = pneg %p1665
      $region122: #{tpu_custom_call.1} parent=5 // pred_check_branch
        %1668 = sbr.rel (%p1666) target = $region124
      $region123: #{tpu_custom_call.1} parent=5 // pred_region
        %s1669 = ssub.s32 %s31, 2
        // Predicated region
        $region125: #{tpu_custom_call.1} parent=123 // pred_check
          %p1670 = pneg %p422
        $region126: #{tpu_custom_call.1} parent=123 // pred_check_branch
          %1672 = sbr.rel (%p1670) target = $region128
        $region127: #{tpu_custom_call.1} parent=123 // pred_region
          %s1673 = sand.u32 %s407, 1
          %s1674 = scalar_lea.sflag [#allocation6], %s1673
          %s1675 = sand.u32 %s407, 1
          %s1676 = smul.addr %s1675, 8
          %s1677 = scalar_lea.vmem [#allocation16], %s1676
          %1678 = dma.done %s1674, 128
        $region128: #{tpu_custom_call.1} parent=123 // pred_fallthru
          _
      $region124: #{tpu_custom_call.1} parent=5 // pred_fallthru
        _
    $region6: #{tpu_custom_call.1} parent=1 // loop_footer
      %s35 = sadd.s32 1, %s31
    $region7: #{tpu_custom_call.1} parent=1 // loop_footer_branch
      %30 = sbr.rel target = $region3
    $region8: #{tpu_custom_call.1} parent=1 // loop_exit
      _
    %1679 = vsyncpa [#allocation5], 1
    %s1680 = scalar_lea.sflag [#allocation5], 1
    %1681 = vsyncpa %s1680, 1
    %1682 = vsyncpa [#allocation8], 1
    %1683 = vsyncpa [#allocation11], 1
    %1684 = vsyncpa [#allocation14], 1
    %1685 = vsyncpa [#allocation6], 1
    %s1686 = scalar_lea.sflag [#allocation6], 1
    %1687 = vsyncpa %s1686, 1

</llo_original>
